<compile_context>
chip_gen: v7x
topology: tpu7x:2x2x1
jax: 0.10.0
libtpu: 0.0.40
codegen_flags: <defaults>
</compile_context>

<pallas_src>
import functools
import math

import jax
import jax.numpy as jnp
from jax import lax
from jax.experimental import pallas as pl
from jax.experimental.pallas import tpu as pltpu

LENS_Z = 64
LENS_X = 256


def _mode_layout(mode, n):
    """(q_start, q_len, k_start, k_len, q_dst, k_dst) along the token axis."""
    if mode in ("s2t", "t2t"):
        q_start, q_len, k_start, k_len = 0, LENS_Z, LENS_Z, n - LENS_Z
        q_dst, k_dst = 0, q_len                       # out = cat([proj, k])
    elif mode == "t2s":
        q_start, q_len, k_start, k_len = LENS_Z, n - LENS_Z, 0, LENS_Z
        q_dst, k_dst = k_len, 0                       # out = cat([k, proj])
    elif mode == "s2s":
        q_start, q_len, k_start, k_len = 0, LENS_X, LENS_X, n - LENS_X
        q_dst, k_dst = 0, q_len                       # out = cat([proj, k])
    else:
        raise ValueError(f"unknown mode: {mode}")
    return q_start, q_len, k_start, k_len, q_dst, k_dst


def _fused_kernel(x_ref, w_ref, b_ref, o_ref, *, q_start, q_len, k_start,
                  k_len, q_dst, k_dst, scale):
    """Fused attention + permutation + projection + concat for one batch tile.

    x_ref: (bt, N, C) VMEM      w_ref: (C, C) VMEM (torch Linear weight, as-is)
    b_ref: (1, C) VMEM (f32)    o_ref: (bt, N, C) VMEM
    """
    bt = x_ref.shape[0]
    C = x_ref.shape[-1]
    m = q_len // C            # number of C-row q blocks (requires C | q_len)

    w = w_ref[...].astype(jnp.float32)          # (C, C); used as  y @ W^T
    bias = b_ref[...].astype(jnp.float32)       # (1, C)

    # Scatter pattern for the transpose(1,2).reshape permutation, hoisted out
    # of all loops:  y[c*m + i, :] = (attention output of q-block i)^T[c, :]
    # S_i[r, c] = 1  iff  r == c*m + i   (exact 0/1 values -> no numeric error)
    rows = lax.broadcasted_iota(jnp.int32, (q_len, C), 0)
    cols = lax.broadcasted_iota(jnp.int32, (q_len, C), 1)

    for bi in range(bt):
        kv = x_ref[bi, k_start:k_start + k_len, :]            # (Lk, C), native dtype

        # ---- concat part: copy the k/v tokens straight into their final slot
        o_ref[bi, k_dst:k_dst + k_len, :] = kv

        # ---- attention over C-row q blocks, permuted output assembled in f32
        y = jnp.zeros((q_len, C), jnp.float32)
        for i in range(m):
            q_i = x_ref[bi, q_start + i * C:q_start + (i + 1) * C, :] * scale  # (C, C)

            # scores (MXU, f32 accumulation) + softmax over the kv axis
            s = lax.dot_general(q_i, kv, (((1,), (1,)), ((), ())),
                                preferred_element_type=jnp.float32)            # (C, Lk)
            s = s - jnp.max(s, axis=-1, keepdims=True)
            p = jnp.exp(s)
            p = p * (1.0 / jnp.sum(p, axis=-1, keepdims=True))

            # block output, already transposed:  Y_i = (p_i @ v)^T
            y_i = lax.dot_general(kv, p.astype(kv.dtype), (((0,), (1,)), ((), ())),
                                  preferred_element_type=jnp.float32)          # (C, C)

            # scatter rows of Y_i to rows {c*m + i} of y via a 0/1 matmul
            s_i = (rows == cols * m + i).astype(jnp.float32)                   # (q_len, C)
            y = y + jnp.dot(s_i, y_i, preferred_element_type=jnp.float32)      # (q_len, C)

        # ---- output projection (y @ W^T + b) in f32, stored into final slot
        proj = lax.dot_general(y, w, (((1,), (1,)), ((), ())),
                               preferred_element_type=jnp.float32) + bias      # (q_len, C)
        o_ref[bi, q_dst:q_dst + q_len, :] = proj.astype(o_ref.dtype)
    # TODO(synk): rpe bias / attention mask / dropout / return_attention paths
    # not implemented (module defaults rpe=False, mask=None, drops=0.0).


def attention_st_forward(x, proj_weight, proj_bias, *, mode="s2t", num_heads=8,
                         batch_tile=1):
    """x: (B, N, C); proj_weight: (C, C); proj_bias: (C,). Returns (B, N, C)."""
    B, N, C = x.shape
    head_dim = C // num_heads
    scale = float(head_dim) ** -0.5
    q_start, q_len, k_start, k_len, q_dst, k_dst = _mode_layout(mode, N)

    if q_len % C != 0:
        # TODO(synk): the in-kernel permutation assumes C divides q_len (true
        # for C in {8,16,32,64} with lens 64/256); general C would need a
        # different permutation scheme.
        raise NotImplementedError("fused Attention_st kernel requires C | q_len")
    if B % batch_tile != 0:
        batch_tile = 1
    bt = batch_tile

    w = jnp.asarray(proj_weight)                              # passed untransposed
    b2d = jnp.asarray(proj_bias).reshape(1, C).astype(jnp.float32)

    kernel = functools.partial(_fused_kernel, q_start=q_start, q_len=q_len,
                               k_start=k_start, k_len=k_len, q_dst=q_dst,
                               k_dst=k_dst, scale=scale)

    return pl.pallas_call(
        kernel,
        out_shape=jax.ShapeDtypeStruct((B, N, C), x.dtype),
        grid=(B // bt,),
        in_specs=[
            pl.BlockSpec((bt, N, C), lambda i: (i, 0, 0)),    # x batch tile
            pl.BlockSpec((C, C), lambda i: (0, 0)),           # proj weight (resident)
            pl.BlockSpec((1, C), lambda i: (0, 0)),           # proj bias
        ],
        out_specs=pl.BlockSpec((bt, N, C), lambda i: (i, 0, 0)),
        compiler_params=pltpu.CompilerParams(
            dimension_semantics=("parallel",)),               # >=2 units for v7x 2-TC
    )(x, w, b2d)


def attention_st_ref(x, proj_weight, proj_bias, *, mode="s2t", num_heads=8):
    """Pure-JAX reference mirroring the PyTorch forward."""
    B, N, C = x.shape
    scale = float(C // num_heads) ** -0.5
    if mode in ("s2t", "t2t"):
        q, k, v = x[:, :LENS_Z], x[:, LENS_Z:], x[:, LENS_Z:]
    elif mode == "t2s":
        q, k, v = x[:, LENS_Z:], x[:, :LENS_Z], x[:, :LENS_Z]
    elif mode == "s2s":
        q, k, v = x[:, :LENS_X], x[:, LENS_X:], x[:, LENS_X:]
    hp = lax.Precision.HIGHEST
    attn = jnp.einsum("bqc,bkc->bqk", q, k, precision=hp) * scale
    attn = jax.nn.softmax(attn, axis=-1)
    o = jnp.einsum("bqk,bkc->bqc", attn, v, precision=hp)
    o = jnp.swapaxes(o, 1, 2).reshape(B, -1, C)               # transpose(1,2).reshape
    o = jnp.einsum("blc,dc->bld", o, proj_weight, precision=hp) + proj_bias
    if mode == "t2s":
        return jnp.concatenate([k, o], axis=1)
    return jnp.concatenate([o, k], axis=1)


if __name__ == "__main__":
    key = jax.random.PRNGKey(0)
    kx, kw, kb = jax.random.split(key, 3)

    B, C, num_heads = 2, 32, 8
    N = LENS_Z + LENS_X                    # forward hard-codes lens_z=64, lens_x=256
    x = jax.random.normal(kx, (B, N, C), dtype=jnp.float32)

    # Deterministic Linear(dim, dim)-style init.
    bound = 1.0 / math.sqrt(C)
    proj_w = jax.random.uniform(kw, (C, C), jnp.float32, -bound, bound)
    proj_b = jax.random.uniform(kb, (C,), jnp.float32, -bound, bound)

    for mode in ("s2t", "t2s", "t2t", "s2s"):
        out = attention_st_forward(x, proj_w, proj_b, mode=mode, num_heads=num_heads)
        out = jax.block_until_ready(out)
        ref = attention_st_ref(x, proj_w, proj_b, mode=mode, num_heads=num_heads)
        assert out.shape == (B, N, C), (mode, out.shape)
        assert jnp.allclose(out, ref, atol=1e-3, rtol=1e-3), mode

    print("KERNEL_OK")
</pallas_src>

<mosaic_0001>
module attributes {stable_mosaic.version = 11 : i64} {
  func.func @_fused_kernel(%arg0: i32, %arg1: memref<1x320x32xf32, #tpu.memory_space<vmem>>, %arg2: memref<32x32xf32, #tpu.memory_space<vmem>>, %arg3: memref<1x32xf32, #tpu.memory_space<vmem>>, %arg4: memref<1x320x32xf32, #tpu.memory_space<vmem>>) attributes {dimension_semantics = [#tpu.dimension_semantics<parallel>], iteration_bounds = array<i64: 2>, scalar_prefetch = 0 : i64, scratch_operands = 0 : i64, tpu.core_type = #tpu.core_type<tc>, window_params = [{transform_indices = @transform_0, window_bounds = array<i64: 1, 320, 32>}, {pipeline_mode = #tpu.pipeline_mode<synchronous>, transform_indices = @transform_1, window_bounds = array<i64: 32, 32>}, {pipeline_mode = #tpu.pipeline_mode<synchronous>, transform_indices = @transform_2, window_bounds = array<i64: 1, 32>}, {transform_indices = @transform_3, window_bounds = array<i64: 1, 320, 32>}]} {
    %c0 = arith.constant 0 : index
    %c0_0 = arith.constant 0 : index
    %0 = vector.load %arg2[%c0, %c0_0] : memref<32x32xf32, #tpu.memory_space<vmem>>, vector<32x32xf32>
    %c0_1 = arith.constant 0 : index
    %c0_2 = arith.constant 0 : index
    %1 = vector.load %arg3[%c0_1, %c0_2] : memref<1x32xf32, #tpu.memory_space<vmem>>, vector<1x32xf32>
    %2 = tpu.iota {dimensions = array<i32: 0>} : vector<64x32xi32>
    %3 = tpu.iota {dimensions = array<i32: 1>} : vector<64x32xi32>
    %c0_3 = arith.constant 0 : index
    %c64 = arith.constant 64 : index
    %c0_4 = arith.constant 0 : index
    %4 = vector.load %arg1[%c0_3, %c64, %c0_4] : memref<1x320x32xf32, #tpu.memory_space<vmem>>, vector<1x256x32xf32>
    %5 = vector.shape_cast %4 : vector<1x256x32xf32> to vector<256x32xf32>
    %c0_5 = arith.constant 0 : index
    %c64_6 = arith.constant 64 : index
    %c0_7 = arith.constant 0 : index
    %6 = vector.load %arg4[%c0_5, %c64_6, %c0_7] : memref<1x320x32xf32, #tpu.memory_space<vmem>>, vector<1x256x32xf32>
    %7 = vector.shape_cast %6 : vector<1x256x32xf32> to vector<256x32xf32>
    %8 = vector.shape_cast %5 : vector<256x32xf32> to vector<1x256x32xf32>
    tpu.vector_store %arg4[%c0_5, %c64_6, %c0_7], %8 {strides = array<i32>} : memref<1x320x32xf32, #tpu.memory_space<vmem>>, vector<1x256x32xf32>,
    %cst = arith.constant 0.000000e+00 : f32
    %9 = vector.broadcast %cst : f32 to vector<64x32xf32>
    %c0_8 = arith.constant 0 : index
    %c0_9 = arith.constant 0 : index
    %c0_10 = arith.constant 0 : index
    %10 = vector.load %arg1[%c0_8, %c0_9, %c0_10] : memref<1x320x32xf32, #tpu.memory_space<vmem>>, vector<1x32x32xf32>
    %11 = vector.shape_cast %10 : vector<1x32x32xf32> to vector<32x32xf32>
    %cst_11 = arith.constant 5.000000e-01 : f32
    %12 = vector.broadcast %cst_11 : f32 to vector<32x32xf32>
    %13 = arith.mulf %11, %12 : vector<32x32xf32>
    %cst_12 = arith.constant dense<0.000000e+00> : vector<32x256xf32>
    %14 = tpu.matmul %13, %5, %cst_12 {dimension_numbers = #tpu.dot_dimension_numbers<[1], [1], [0], [0], [0, 0, 1, 0], [], []>} : vector<32x32xf32>, vector<256x32xf32>, vector<32x256xf32> -> vector<32x256xf32>
    %cst_13 = arith.constant dense<0xFF800000> : vector<32xf32>
    %15 = vector.multi_reduction <maximumf>, %14, %cst_13 [1] : vector<32x256xf32> to vector<32xf32>
    %16 = vector.shape_cast %15 : vector<32xf32> to vector<32x1xf32>
    %17 = vector.broadcast %16 : vector<32x1xf32> to vector<32x256xf32>
    %18 = arith.subf %14, %17 : vector<32x256xf32>
    %19 = math.exp %18 : vector<32x256xf32>
    %cst_14 = arith.constant dense<0.000000e+00> : vector<32xf32>
    %20 = vector.multi_reduction <add>, %19, %cst_14 [1] : vector<32x256xf32> to vector<32xf32>
    %21 = vector.shape_cast %20 : vector<32xf32> to vector<32x1xf32>
    %cst_15 = arith.constant 1.000000e+00 : f32
    %22 = vector.broadcast %cst_15 : f32 to vector<32x1xf32>
    %23 = arith.divf %22, %21 : vector<32x1xf32>
    %24 = vector.broadcast %23 : vector<32x1xf32> to vector<32x256xf32>
    %25 = arith.mulf %19, %24 : vector<32x256xf32>
    %cst_16 = arith.constant dense<0.000000e+00> : vector<32x32xf32>
    %26 = tpu.matmul %5, %25, %cst_16 {dimension_numbers = #tpu.dot_dimension_numbers<[0], [1], [1], [0], [0, 1, 1, 0], [], []>} : vector<256x32xf32>, vector<32x256xf32>, vector<32x32xf32> -> vector<32x32xf32>
    %c2_i32 = arith.constant 2 : i32
    %27 = vector.broadcast %c2_i32 : i32 to vector<64x32xi32>
    %28 = arith.muli %3, %27 : vector<64x32xi32>
    %c0_i32 = arith.constant 0 : i32
    %29 = vector.broadcast %c0_i32 : i32 to vector<64x32xi32>
    %30 = arith.addi %28, %29 : vector<64x32xi32>
    %31 = arith.cmpi eq, %2, %30 : vector<64x32xi32>
    %32 = arith.extui %31 : vector<64x32xi1> to vector<64x32xi32>
    %33 = arith.sitofp %32 : vector<64x32xi32> to vector<64x32xf32>
    %cst_17 = arith.constant dense<0.000000e+00> : vector<64x32xf32>
    %34 = tpu.matmul %33, %26, %cst_17 {dimension_numbers = #tpu.dot_dimension_numbers<[1], [0], [0], [1], [0, 0, 1, 1], [], []>} : vector<64x32xf32>, vector<32x32xf32>, vector<64x32xf32> -> vector<64x32xf32>
    %35 = arith.addf %9, %34 : vector<64x32xf32>
    %c0_18 = arith.constant 0 : index
    %c32 = arith.constant 32 : index
    %c0_19 = arith.constant 0 : index
    %36 = vector.load %arg1[%c0_18, %c32, %c0_19] : memref<1x320x32xf32, #tpu.memory_space<vmem>>, vector<1x32x32xf32>
    %37 = vector.shape_cast %36 : vector<1x32x32xf32> to vector<32x32xf32>
    %cst_20 = arith.constant 5.000000e-01 : f32
    %38 = vector.broadcast %cst_20 : f32 to vector<32x32xf32>
    %39 = arith.mulf %37, %38 : vector<32x32xf32>
    %cst_21 = arith.constant dense<0.000000e+00> : vector<32x256xf32>
    %40 = tpu.matmul %39, %5, %cst_21 {dimension_numbers = #tpu.dot_dimension_numbers<[1], [1], [0], [0], [0, 0, 1, 0], [], []>} : vector<32x32xf32>, vector<256x32xf32>, vector<32x256xf32> -> vector<32x256xf32>
    %cst_22 = arith.constant dense<0xFF800000> : vector<32xf32>
    %41 = vector.multi_reduction <maximumf>, %40, %cst_22 [1] : vector<32x256xf32> to vector<32xf32>
    %42 = vector.shape_cast %41 : vector<32xf32> to vector<32x1xf32>
    %43 = vector.broadcast %42 : vector<32x1xf32> to vector<32x256xf32>
    %44 = arith.subf %40, %43 : vector<32x256xf32>
    %45 = math.exp %44 : vector<32x256xf32>
    %cst_23 = arith.constant dense<0.000000e+00> : vector<32xf32>
    %46 = vector.multi_reduction <add>, %45, %cst_23 [1] : vector<32x256xf32> to vector<32xf32>
    %47 = vector.shape_cast %46 : vector<32xf32> to vector<32x1xf32>
    %cst_24 = arith.constant 1.000000e+00 : f32
    %48 = vector.broadcast %cst_24 : f32 to vector<32x1xf32>
    %49 = arith.divf %48, %47 : vector<32x1xf32>
    %50 = vector.broadcast %49 : vector<32x1xf32> to vector<32x256xf32>
    %51 = arith.mulf %45, %50 : vector<32x256xf32>
    %cst_25 = arith.constant dense<0.000000e+00> : vector<32x32xf32>
    %52 = tpu.matmul %5, %51, %cst_25 {dimension_numbers = #tpu.dot_dimension_numbers<[0], [1], [1], [0], [0, 1, 1, 0], [], []>} : vector<256x32xf32>, vector<32x256xf32>, vector<32x32xf32> -> vector<32x32xf32>
    %c2_i32_26 = arith.constant 2 : i32
    %53 = vector.broadcast %c2_i32_26 : i32 to vector<64x32xi32>
    %54 = arith.muli %3, %53 : vector<64x32xi32>
    %c1_i32 = arith.constant 1 : i32
    %55 = vector.broadcast %c1_i32 : i32 to vector<64x32xi32>
    %56 = arith.addi %54, %55 : vector<64x32xi32>
    %57 = arith.cmpi eq, %2, %56 : vector<64x32xi32>
    %58 = arith.extui %57 : vector<64x32xi1> to vector<64x32xi32>
    %59 = arith.sitofp %58 : vector<64x32xi32> to vector<64x32xf32>
    %cst_27 = arith.constant dense<0.000000e+00> : vector<64x32xf32>
    %60 = tpu.matmul %59, %52, %cst_27 {dimension_numbers = #tpu.dot_dimension_numbers<[1], [0], [0], [1], [0, 0, 1, 1], [], []>} : vector<64x32xf32>, vector<32x32xf32>, vector<64x32xf32> -> vector<64x32xf32>
    %61 = arith.addf %35, %60 : vector<64x32xf32>
    %cst_28 = arith.constant dense<0.000000e+00> : vector<64x32xf32>
    %62 = tpu.matmul %61, %0, %cst_28 {dimension_numbers = #tpu.dot_dimension_numbers<[1], [1], [0], [0], [0, 0, 1, 0], [], []>} : vector<64x32xf32>, vector<32x32xf32>, vector<64x32xf32> -> vector<64x32xf32>
    %63 = vector.broadcast %1 : vector<1x32xf32> to vector<64x32xf32>
    %64 = arith.addf %62, %63 : vector<64x32xf32>
    %c0_29 = arith.constant 0 : index
    %c0_30 = arith.constant 0 : index
    %c0_31 = arith.constant 0 : index
    %65 = vector.load %arg4[%c0_29, %c0_30, %c0_31] : memref<1x320x32xf32, #tpu.memory_space<vmem>>, vector<1x64x32xf32>
    %66 = vector.shape_cast %65 : vector<1x64x32xf32> to vector<64x32xf32>
    %67 = vector.shape_cast %64 : vector<64x32xf32> to vector<1x64x32xf32>
    tpu.vector_store %arg4[%c0_29, %c0_30, %c0_31], %67 {strides = array<i32>} : memref<1x320x32xf32, #tpu.memory_space<vmem>>, vector<1x64x32xf32>,
    return
  }
  func.func @transform_0(%arg0: i32) -> (i32, i32, i32) {
    %c0_i32 = arith.constant 0 : i32
    %c0_i32_0 = arith.constant 0 : i32
    %c0_i32_1 = arith.constant 0 : i32
    return %arg0, %c0_i32, %c0_i32_0 : i32, i32, i32
  }
  func.func @transform_1(%arg0: i32) -> (i32, i32) {
    %c0_i32 = arith.constant 0 : i32
    %c0_i32_0 = arith.constant 0 : i32
    %c0_i32_1 = arith.constant 0 : i32
    return %c0_i32, %c0_i32_0 : i32, i32
  }
  func.func @transform_2(%arg0: i32) -> (i32, i32) {
    %c0_i32 = arith.constant 0 : i32
    %c0_i32_0 = arith.constant 0 : i32
    %c0_i32_1 = arith.constant 0 : i32
    return %c0_i32, %c0_i32_0 : i32, i32
  }
  func.func @transform_3(%arg0: i32) -> (i32, i32, i32) {
    %c0_i32 = arith.constant 0 : i32
    %c0_i32_0 = arith.constant 0 : i32
    %c0_i32_1 = arith.constant 0 : i32
    return %arg0, %c0_i32, %c0_i32_0 : i32, i32, i32
  }
}

</mosaic_0001>

<llo_original>
// kernel: tpu_custom_call.1
$region0: #{tpu_custom_call.1}
  #allocation0 [shape = 'u32[]', space=smem, size = 0x4, offset = 0x4, fixed_abs, tag = 'smem constant byte address 0x4 - core index']
  #allocation1 [shape = 'u32[144,128]{1,0:T(1,128)}', space=vmem, size = 0x12000, scoped, tag = 'internal scratch']
  %s0 = inlined_call_operand.vmem [shape: f32[2,320,32], index: 0, kind: input, shape index: {}]
  %s1 = inlined_call_operand.vmem [shape: f32[32,32], index: 1, kind: input, shape index: {}]
  %s2 = inlined_call_operand.vmem [shape: f32[1,32], index: 2, kind: input, shape index: {}]
  %s3 = inlined_call_operand.vmem [shape: f32[2,320,32], index: 3, kind: output, shape index: {}]
  %s4 = sld [smem:[#allocation0]]
  $region45: #{tpu_custom_call.1} parent=0
    _
  %s6 = ssub.s32 1, %s4
  %s7 = scalar_select 0, %s6, %s4
  loop: start=0, step=1, limit=4
  $region2: #{tpu_custom_call.1} parent=0 // loop_pre_header
    _
  $region3: #{tpu_custom_call.1} parent=0 // loop_header
    %s9 = sphi 0, %s13
    %p10 = scmp.ge.s32.totalorder %s9, 4
    %s19 = sphi 0, %s21
    %s22 = sphi 0, %s19
    %s23 = sphi 0, %s22
    %s39 = sphi 0, %s23
    %s43 = sphi 0, %s43
    %s45 = sphi 0, %s43
    %s46 = sphi 0, %s45
    %s60 = sphi 0, %s46
    %s64 = sphi 0, %s64
    %s66 = sphi 0, %s64
    %s67 = sphi 0, %s66
    %s81 = sphi 0, %s67
    %s87 = sphi 0, %s89
    %s90 = sphi 0, %s87
    %s91 = sphi 0, %s90
    %s107 = sphi 0, %s91
  $region4: #{tpu_custom_call.1} parent=0 // loop_header_branch
    %12 = sbr.rel (%p10) target = $region8
  $region5: #{tpu_custom_call.1} parent=0 // loop_body
    %s14 = ssub.s32 %s9, 1
    %s15 = ssub.s32 %s9, 2
    %s16 = sadd.s32 %s9, 1
    %s17 = ssub.s32 %s9, %s16
    %p18 = scmp.eq.s32.totalorder %s17, 0
    %s20 = sadd.s32 %s19, 1
    %s21 = scalar_select %p18, %s19, %s20
    %p24 = pneg %p18
    %p25 = scmp.eq.s32.totalorder %s9, 1
    %p26 = por %p24, %p25
    %p27 = scmp.ne.s32.totalorder %s19, %s22
    %p28 = scmp.eq.s32.totalorder %s9, 0
    %p29 = por %p27, %p28
    %p30 = scmp.ne.s32.totalorder %s19, %s22
    %p31 = scmp.eq.s32.totalorder %s14, 1
    %p32 = por %p30, %p31
    %p33 = scmp.ne.s32.totalorder %s22, %s23
    %p34 = scmp.eq.s32.totalorder %s14, 0
    %p35 = por %p33, %p34
    %p36 = scmp.ne.s32.totalorder %s22, %s23
    %p37 = scmp.eq.s32.totalorder %s15, 1
    %p38 = por %p36, %p37
    %p40 = scmp.ne.s32.totalorder %s23, %s39
    %p41 = scmp.eq.s32.totalorder %s15, 0
    %p42 = por %p40, %p41
    %s44 = sadd.s32 %s43, 1
    %p47 = scmp.eq.s32.totalorder %s9, 1
    %p48 = scmp.ne.s32.totalorder %s43, %s45
    %p49 = scmp.eq.s32.totalorder %s9, 0
    %p50 = por %p48, %p49
    %p51 = scmp.ne.s32.totalorder %s43, %s45
    %p52 = scmp.eq.s32.totalorder %s14, 1
    %p53 = por %p51, %p52
    %p54 = scmp.ne.s32.totalorder %s45, %s46
    %p55 = scmp.eq.s32.totalorder %s14, 0
    %p56 = por %p54, %p55
    %p57 = scmp.ne.s32.totalorder %s45, %s46
    %p58 = scmp.eq.s32.totalorder %s15, 1
    %p59 = por %p57, %p58
    %p61 = scmp.ne.s32.totalorder %s46, %s60
    %p62 = scmp.eq.s32.totalorder %s15, 0
    %p63 = por %p61, %p62
    %s65 = sadd.s32 %s64, 1
    %p68 = scmp.eq.s32.totalorder %s9, 1
    %p69 = scmp.ne.s32.totalorder %s64, %s66
    %p70 = scmp.eq.s32.totalorder %s9, 0
    %p71 = por %p69, %p70
    %p72 = scmp.ne.s32.totalorder %s64, %s66
    %p73 = scmp.eq.s32.totalorder %s14, 1
    %p74 = por %p72, %p73
    %p75 = scmp.ne.s32.totalorder %s66, %s67
    %p76 = scmp.eq.s32.totalorder %s14, 0
    %p77 = por %p75, %p76
    %p78 = scmp.ne.s32.totalorder %s66, %s67
    %p79 = scmp.eq.s32.totalorder %s15, 1
    %p80 = por %p78, %p79
    %p82 = scmp.ne.s32.totalorder %s67, %s81
    %p83 = scmp.eq.s32.totalorder %s15, 0
    %p84 = por %p82, %p83
    %s85 = ssub.s32 %s9, %s16
    %p86 = scmp.eq.s32.totalorder %s85, 0
    %s88 = sadd.s32 %s87, 1
    %s89 = scalar_select %p86, %s87, %s88
    %p92 = pneg %p86
    %p93 = scmp.eq.s32.totalorder %s9, 1
    %p94 = por %p92, %p93
    %p95 = scmp.ne.s32.totalorder %s87, %s90
    %p96 = scmp.eq.s32.totalorder %s9, 0
    %p97 = por %p95, %p96
    %p98 = scmp.ne.s32.totalorder %s87, %s90
    %p99 = scmp.eq.s32.totalorder %s14, 1
    %p100 = por %p98, %p99
    %p101 = scmp.ne.s32.totalorder %s90, %s91
    %p102 = scmp.eq.s32.totalorder %s14, 0
    %p103 = por %p101, %p102
    %p104 = scmp.ne.s32.totalorder %s90, %s91
    %p105 = scmp.eq.s32.totalorder %s15, 1
    %p106 = por %p104, %p105
    %p108 = scmp.ne.s32.totalorder %s91, %s107
    %p109 = scmp.eq.s32.totalorder %s15, 0
    %p110 = por %p108, %p109
    %p111 = scmp.le.s32.totalorder 1, %s9
    %p112 = scmp.lt.s32.totalorder %s9, 3
    %p113 = pnand %p111, %p112
    %p114 = pneg %p113
    // Predicated region
    $region9: #{tpu_custom_call.1} parent=5 // pred_check
      _
    $region10: #{tpu_custom_call.1} parent=5 // pred_check_branch
      %116 = sbr.rel (%p113) target = $region12
    $region11: #{tpu_custom_call.1} parent=5 // pred_region
      %s117 = ssub.s32 %s9, 1
      // Predicated region
      $region13: #{tpu_custom_call.1} parent=11 // pred_check
        %p118 = pneg %p56
      $region14: #{tpu_custom_call.1} parent=11 // pred_check_branch
        %120 = sbr.rel (%p118) target = $region16
      $region15: #{tpu_custom_call.1} parent=11 // pred_region
        _
      $region16: #{tpu_custom_call.1} parent=11 // pred_fallthru
        _
      // Predicated region
      $region17: #{tpu_custom_call.1} parent=11 // pred_check
        %p121 = pneg %p77
      $region18: #{tpu_custom_call.1} parent=11 // pred_check_branch
        %123 = sbr.rel (%p121) target = $region20
      $region19: #{tpu_custom_call.1} parent=11 // pred_region
        _
      $region20: #{tpu_custom_call.1} parent=11 // pred_fallthru
        _
    $region12: #{tpu_custom_call.1} parent=5 // pred_fallthru
      _
    %p124 = scmp.lt.s32.totalorder %s9, 2
    // Predicated region
    $region21: #{tpu_custom_call.1} parent=5 // pred_check
      %p125 = pneg %p124
    $region22: #{tpu_custom_call.1} parent=5 // pred_check_branch
      %127 = sbr.rel (%p125) target = $region24
    $region23: #{tpu_custom_call.1} parent=5 // pred_region
      // Predicated region
      $region25: #{tpu_custom_call.1} parent=23 // pred_check
        %p128 = pneg %p29
      $region26: #{tpu_custom_call.1} parent=23 // pred_check_branch
        %130 = sbr.rel (%p128) target = $region28
      $region27: #{tpu_custom_call.1} parent=23 // pred_region
        %p131 = scmp.lt.s32.totalorder %s9, 1
        %s132 = scalar_select %p131, %s9, 1
        %s133 = smul.addr %s132, 40
        %s134 = smul.addr %s133, 8
        %s135 = scalar_lea.vmem %s0, %s134
      $region28: #{tpu_custom_call.1} parent=23 // pred_fallthru
        _
    $region24: #{tpu_custom_call.1} parent=5 // pred_fallthru
      _
    %p136 = scmp.le.s32.totalorder 1, %s9
    %p137 = scmp.lt.s32.totalorder %s9, 3
    %p138 = pnand %p136, %p137
    %p139 = pneg %p138
    // Predicated region
    $region29: #{tpu_custom_call.1} parent=5 // pred_check
      _
    $region30: #{tpu_custom_call.1} parent=5 // pred_check_branch
      %141 = sbr.rel (%p138) target = $region32
    $region31: #{tpu_custom_call.1} parent=5 // pred_region
      %s142 = ssub.s32 %s9, 1
      %p143 = scmp.lt.s32.totalorder %s14, 1
      %s144 = scalar_select %p143, %s14, 1
      %s145 = smul.addr %s144, 40
      %s146 = smul.addr %s145, 8
      %s147 = scalar_lea.vmem %s0, %s146
      %p148 = pneg %p35
      %p149 = pneg %p32
      %p150 = pneg %p56
      %p151 = pneg %p53
      %p152 = pneg %p77
      %p153 = pneg %p74
      %p154 = pneg %p103
      %p155 = pneg %p100
      %p156 = scmp.lt.s32.totalorder %s14, 1
      %s157 = scalar_select %p156, %s14, 1
      %s158 = smul.addr %s157, 40
      %s159 = smul.addr %s158, 8
      %s160 = scalar_lea.vmem %s3, %s159
      %p161 = scmp.lt.s32.totalorder %s14, 1
      %s162 = scalar_select %p161, %s14, 1
      %s163 = smul.addr %s162, 40
      %s164 = smul.addr %s163, 8
      %s165 = scalar_lea.vmem %s0, %s164
      %p166 = scmp.lt.s32.totalorder %s14, 1
      %s167 = scalar_select %p166, %s14, 1
      %s168 = smul.addr %s167, 40
      %s169 = smul.addr %s168, 8
      %s170 = scalar_lea.vmem %s3, %s169
      %v171 = vld [vmem:[%s1] sm:$0xff]
      %v172 = vld [vmem:[%s1 + $0x8] sm:$0xff]
      %v173 = vld [vmem:[%s1 + $0x10] sm:$0xff]
      %v174 = vld [vmem:[%s1 + $0x18] sm:$0xff]
      %v175 = vld [vmem:[%s2] sm:$0x1]
      %v176 = vlaneseq
      %v177 = vshrl.u32 %v176, 7
      %v178 = vadd.s32 %v177, 8
      %v179 = vadd.s32 %v177, 16
      %v180 = vadd.s32 %v177, 24
      %v181 = vadd.s32 %v177, 32
      %v182 = vadd.s32 %v177, 40
      %v183 = vadd.s32 %v177, 48
      %v184 = vadd.s32 %v177, 56
      %v185 = vlaneseq
      %v186 = vand.u32 %v185, 127
      %v187 = vld [vmem:[%s165 + $0x40] sm:$0xff]
      %v188 = vld [vmem:[%s165 + $0x48] sm:$0xff]
      %v189 = vld [vmem:[%s165 + $0x50] sm:$0xff]
      %v190 = vld [vmem:[%s165 + $0x58] sm:$0xff]
      %v191 = vld [vmem:[%s165 + $0x60] sm:$0xff]
      %v192 = vld [vmem:[%s165 + $0x68] sm:$0xff]
      %v193 = vld [vmem:[%s165 + $0x70] sm:$0xff]
      %v194 = vld [vmem:[%s165 + $0x78] sm:$0xff]
      %v195 = vld [vmem:[%s165 + $0x80] sm:$0xff]
      %v196 = vld [vmem:[%s165 + $0x88] sm:$0xff]
      %v197 = vld [vmem:[%s165 + $0x90] sm:$0xff]
      %v198 = vld [vmem:[%s165 + $0x98] sm:$0xff]
      %v199 = vld [vmem:[%s165 + $0xa0] sm:$0xff]
      %v200 = vld [vmem:[%s165 + $0xa8] sm:$0xff]
      %v201 = vld [vmem:[%s165 + $0xb0] sm:$0xff]
      %v202 = vld [vmem:[%s165 + $0xb8] sm:$0xff]
      %v203 = vld [vmem:[%s165 + $0xc0] sm:$0xff]
      %v204 = vld [vmem:[%s165 + $0xc8] sm:$0xff]
      %v205 = vld [vmem:[%s165 + $0xd0] sm:$0xff]
      %v206 = vld [vmem:[%s165 + $0xd8] sm:$0xff]
      %v207 = vld [vmem:[%s165 + $0xe0] sm:$0xff]
      %v208 = vld [vmem:[%s165 + $0xe8] sm:$0xff]
      %v209 = vld [vmem:[%s165 + $0xf0] sm:$0xff]
      %v210 = vld [vmem:[%s165 + $0xf8] sm:$0xff]
      %v211 = vld [vmem:[%s165 + $0x100] sm:$0xff]
      %v212 = vld [vmem:[%s165 + $0x108] sm:$0xff]
      %v213 = vld [vmem:[%s165 + $0x110] sm:$0xff]
      %v214 = vld [vmem:[%s165 + $0x118] sm:$0xff]
      %v215 = vld [vmem:[%s165 + $0x120] sm:$0xff]
      %v216 = vld [vmem:[%s165 + $0x128] sm:$0xff]
      %v217 = vld [vmem:[%s165 + $0x130] sm:$0xff]
      %v218 = vld [vmem:[%s165 + $0x138] sm:$0xff]
      %vm219 = vcmask 261120
      %220 = vst.msk [vmem:[%s170 + $0x40] sm:$0xff] %vm219, %v187
      %221 = vst.msk [vmem:[%s170 + $0x48] sm:$0xff] %vm219, %v188
      %222 = vst.msk [vmem:[%s170 + $0x50] sm:$0xff] %vm219, %v189
      %223 = vst.msk [vmem:[%s170 + $0x58] sm:$0xff] %vm219, %v190
      %224 = vst.msk [vmem:[%s170 + $0x60] sm:$0xff] %vm219, %v191
      %225 = vst.msk [vmem:[%s170 + $0x68] sm:$0xff] %vm219, %v192
      %226 = vst.msk [vmem:[%s170 + $0x70] sm:$0xff] %vm219, %v193
      %227 = vst.msk [vmem:[%s170 + $0x78] sm:$0xff] %vm219, %v194
      %228 = vst.msk [vmem:[%s170 + $0x80] sm:$0xff] %vm219, %v195
      %229 = vst.msk [vmem:[%s170 + $0x88] sm:$0xff] %vm219, %v196
      %230 = vst.msk [vmem:[%s170 + $0x90] sm:$0xff] %vm219, %v197
      %231 = vst.msk [vmem:[%s170 + $0x98] sm:$0xff] %vm219, %v198
      %232 = vst.msk [vmem:[%s170 + $0xa0] sm:$0xff] %vm219, %v199
      %233 = vst.msk [vmem:[%s170 + $0xa8] sm:$0xff] %vm219, %v200
      %234 = vst.msk [vmem:[%s170 + $0xb0] sm:$0xff] %vm219, %v201
      %235 = vst.msk [vmem:[%s170 + $0xb8] sm:$0xff] %vm219, %v202
      %236 = vst.msk [vmem:[%s170 + $0xc0] sm:$0xff] %vm219, %v203
      %237 = vst.msk [vmem:[%s170 + $0xc8] sm:$0xff] %vm219, %v204
      %238 = vst.msk [vmem:[%s170 + $0xd0] sm:$0xff] %vm219, %v205
      %239 = vst.msk [vmem:[%s170 + $0xd8] sm:$0xff] %vm219, %v206
      %240 = vst.msk [vmem:[%s170 + $0xe0] sm:$0xff] %vm219, %v207
      %241 = vst.msk [vmem:[%s170 + $0xe8] sm:$0xff] %vm219, %v208
      %242 = vst.msk [vmem:[%s170 + $0xf0] sm:$0xff] %vm219, %v209
      %243 = vst.msk [vmem:[%s170 + $0xf8] sm:$0xff] %vm219, %v210
      %244 = vst.msk [vmem:[%s170 + $0x100] sm:$0xff] %vm219, %v211
      %245 = vst.msk [vmem:[%s170 + $0x108] sm:$0xff] %vm219, %v212
      %246 = vst.msk [vmem:[%s170 + $0x110] sm:$0xff] %vm219, %v213
      %247 = vst.msk [vmem:[%s170 + $0x118] sm:$0xff] %vm219, %v214
      %248 = vst.msk [vmem:[%s170 + $0x120] sm:$0xff] %vm219, %v215
      %249 = vst.msk [vmem:[%s170 + $0x128] sm:$0xff] %vm219, %v216
      %250 = vst.msk [vmem:[%s170 + $0x130] sm:$0xff] %vm219, %v217
      %251 = vst.msk [vmem:[%s170 + $0x138] sm:$0xff] %vm219, %v218
      %v252 = vld [vmem:[%s165] sm:$0xff]
      %v253 = vld [vmem:[%s165 + $0x8] sm:$0xff]
      %v254 = vld [vmem:[%s165 + $0x10] sm:$0xff]
      %v255 = vld [vmem:[%s165 + $0x18] sm:$0xff]
      %v256 = vmul.f32 %v252, 0.5
      %v257 = vmul.f32 %v253, 0.5
      %v258 = vmul.f32 %v254, 0.5
      %v259 = vmul.f32 %v255, 0.5
      %v261 = vsel %vm219, %v256, 0
      %v264 = vsel %vm219, %v257, 0
      %v267 = vsel %vm219, %v258, 0
      %v270 = vsel %vm219, %v259, 0
      %v273 = vsel %vm219, %v187, 0
      %v276 = vsel %vm219, %v188, 0
      %v279 = vsel %vm219, %v189, 0
      %v282 = vsel %vm219, %v190, 0
      %v285 = vsel %vm219, %v191, 0
      %v288 = vsel %vm219, %v192, 0
      %v291 = vsel %vm219, %v193, 0
      %v294 = vsel %vm219, %v194, 0
      %v297 = vsel %vm219, %v195, 0
      %v300 = vsel %vm219, %v196, 0
      %v303 = vsel %vm219, %v197, 0
      %v306 = vsel %vm219, %v198, 0
      %v309 = vsel %vm219, %v199, 0
      %v312 = vsel %vm219, %v200, 0
      %v315 = vsel %vm219, %v201, 0
      %v318 = vsel %vm219, %v202, 0
      %v321 = vsel %vm219, %v203, 0
      %v324 = vsel %vm219, %v204, 0
      %v327 = vsel %vm219, %v205, 0
      %v330 = vsel %vm219, %v206, 0
      %v333 = vsel %vm219, %v207, 0
      %v336 = vsel %vm219, %v208, 0
      %v339 = vsel %vm219, %v209, 0
      %v342 = vsel %vm219, %v210, 0
      %v345 = vsel %vm219, %v211, 0
      %v348 = vsel %vm219, %v212, 0
      %v351 = vsel %vm219, %v213, 0
      %v354 = vsel %vm219, %v214, 0
      %v357 = vsel %vm219, %v215, 0
      %v360 = vsel %vm219, %v216, 0
      %v363 = vsel %vm219, %v217, 0
      %v366 = vsel %vm219, %v218, 0
      %368 = vmatprep.subr.mxu0 0.0
      %369 = vmatpush1.xpose.msra.mxu0 %v273
      %370 = vmatprep.subr.mxu0 0.0
      %371 = vmatpush1.xpose.msra.mxu0 %v276
      %372 = vmatprep.subr.mxu0 0.0
      %373 = vmatpush1.xpose.msra.mxu0 %v279
      %374 = vmatprep.subr.mxu0 0.0
      %375 = vmatpush1.xpose.msra.mxu0 %v282
      %376 = vmatprep.subr.mxu0 0.0
      %377 = vmatpush1.xpose.msra.mxu0 %v285
      %378 = vmatprep.subr.mxu0 0.0
      %379 = vmatpush1.xpose.msra.mxu0 %v288
      %380 = vmatprep.subr.mxu0 0.0
      %381 = vmatpush1.xpose.msra.mxu0 %v291
      %382 = vmatprep.subr.mxu0 0.0
      %383 = vmatpush1.xpose.msra.mxu0 %v294
      %384 = vmatprep.subr.mxu0 0.0
      %385 = vmatpush1.xpose.msra.mxu0 %v297
      %386 = vmatprep.subr.mxu0 0.0
      %387 = vmatpush1.xpose.msra.mxu0 %v300
      %388 = vmatprep.subr.mxu0 0.0
      %389 = vmatpush1.xpose.msra.mxu0 %v303
      %390 = vmatprep.subr.mxu0 0.0
      %391 = vmatpush1.xpose.msra.mxu0 %v306
      %392 = vmatprep.subr.mxu0 0.0
      %393 = vmatpush1.xpose.msra.mxu0 %v309
      %394 = vmatprep.subr.mxu0 0.0
      %395 = vmatpush1.xpose.msra.mxu0 %v312
      %396 = vmatprep.subr.mxu0 0.0
      %397 = vmatpush1.xpose.msra.mxu0 %v315
      %398 = vmatprep.subr.mxu0 0.0
      %399 = vmatpush1.xpose.msra.mxu0 %v318
      %400 = vmatprep.subr.mxu0 0.0
      %401 = vmatpush1.xpose.msra.mxu0 %v321
      %402 = vmatprep.subr.mxu0 0.0
      %403 = vmatpush1.xpose.msra.mxu0 %v324
      %404 = vmatprep.subr.mxu0 0.0
      %405 = vmatpush1.xpose.msra.mxu0 %v327
      %406 = vmatprep.subr.mxu0 0.0
      %407 = vmatpush1.xpose.msra.mxu0 %v330
      %408 = vmatprep.subr.mxu0 0.0
      %409 = vmatpush1.xpose.msra.mxu0 %v333
      %410 = vmatprep.subr.mxu0 0.0
      %411 = vmatpush1.xpose.msra.mxu0 %v336
      %412 = vmatprep.subr.mxu0 0.0
      %413 = vmatpush1.xpose.msra.mxu0 %v339
      %414 = vmatprep.subr.mxu0 0.0
      %415 = vmatpush1.xpose.msra.mxu0 %v342
      %416 = vmatprep.subr.mxu0 0.0
      %417 = vmatpush1.xpose.msra.mxu0 %v345
      %418 = vmatprep.subr.mxu0 0.0
      %419 = vmatpush1.xpose.msra.mxu0 %v348
      %420 = vmatprep.subr.mxu0 0.0
      %421 = vmatpush1.xpose.msra.mxu0 %v351
      %422 = vmatprep.subr.mxu0 0.0
      %423 = vmatpush1.xpose.msra.mxu0 %v354
      %424 = vmatprep.subr.mxu0 0.0
      %425 = vmatpush1.xpose.msra.mxu0 %v357
      %426 = vmatprep.subr.mxu0 0.0
      %427 = vmatpush1.xpose.msra.mxu0 %v360
      %428 = vmatprep.subr.mxu0 0.0
      %429 = vmatpush1.xpose.msra.mxu0 %v363
      %430 = vmatprep.subr.mxu0 0.0
      %431 = vmatpush1.xpose.msra.mxu0 %v366
      %432 = vmatprep.mubr.f32.mxu0 0.0
      %433 = vmatmul.mubr.f32.gmra.mrb[0].mxu0 %v261
      %v434 = vpop.f32.mrb[0].mxu0
      %v435 = vadd.f32 0.0, %v434
      %v436 = vpop.f32.mrb[0].mxu0
      %v437 = vadd.f32 0.0, %v436
      %438 = vmatprep.mubr.f32.mxu0 0.0
      %439 = vmatmul.mubr.f32.gmra.mrb[0].mxu0 %v264
      %v440 = vpop.f32.mrb[0].mxu0
      %v441 = vadd.f32 0.0, %v440
      %v442 = vpop.f32.mrb[0].mxu0
      %v443 = vadd.f32 0.0, %v442
      %444 = vmatprep.mubr.f32.mxu0 0.0
      %445 = vmatmul.mubr.f32.gmra.mrb[0].mxu0 %v267
      %v446 = vpop.f32.mrb[0].mxu0
      %v447 = vadd.f32 0.0, %v446
      %v448 = vpop.f32.mrb[0].mxu0
      %v449 = vadd.f32 0.0, %v448
      %450 = vmatprep.mubr.f32.mxu0 0.0
      %451 = vmatmul.mubr.f32.gmra.mrb[0].mxu0 %v270
      %v452 = vpop.f32.mrb[0].mxu0
      %v453 = vadd.f32 0.0, %v452
      %v454 = vpop.f32.mrb[0].mxu0
      %v455 = vadd.f32 0.0, %v454
      %456 = vdwg.mxu0
      %v457 = vmax.f32 %v435, %v437
      %458 = vmax.xlane.f32.xlu0 %v457
      %v459 = vpop.xlane.xlu0 %458
      %v460 = vmax.f32 %v441, %v443
      %461 = vmax.xlane.f32.xlu0 %v460
      %v462 = vpop.xlane.xlu0 %461
      %v463 = vmax.f32 %v447, %v449
      %464 = vmax.xlane.f32.xlu0 %v463
      %v465 = vpop.xlane.xlu0 %464
      %v466 = vmax.f32 %v453, %v455
      %467 = vmax.xlane.f32.xlu0 %v466
      %v468 = vpop.xlane.xlu0 %467
      %v469 = vsub.f32 %v435, %v459
      %v470 = vsub.f32 %v437, %v459
      %v471 = vsub.f32 %v441, %v462
      %v472 = vsub.f32 %v443, %v462
      %v473 = vsub.f32 %v447, %v465
      %v474 = vsub.f32 %v449, %v465
      %v475 = vsub.f32 %v453, %v468
      %v476 = vsub.f32 %v455, %v468
      %v477 = vmul.f32 %v469, 1.442695
      %v478 = vpow.pop %v477
      %v479 = vmul.f32 %v470, 1.442695
      %v480 = vpow.pop %v479
      %v481 = vmul.f32 %v471, 1.442695
      %v482 = vpow.pop %v481
      %v483 = vmul.f32 %v472, 1.442695
      %v484 = vpow.pop %v483
      %v485 = vmul.f32 %v473, 1.442695
      %v486 = vpow.pop %v485
      %v487 = vmul.f32 %v474, 1.442695
      %v488 = vpow.pop %v487
      %v489 = vmul.f32 %v475, 1.442695
      %v490 = vpow.pop %v489
      %v491 = vmul.f32 %v476, 1.442695
      %v492 = vpow.pop %v491
      %v493 = vadd.f32 %v478, %v480
      %494 = vadd.xlane.f32.xlu0 %v493
      %v495 = vpop.xlane.xlu0 %494
      %v496 = vadd.f32 %v482, %v484
      %497 = vadd.xlane.f32.xlu0 %v496
      %v498 = vpop.xlane.xlu0 %497
      %v499 = vadd.f32 %v486, %v488
      %500 = vadd.xlane.f32.xlu0 %v499
      %v501 = vpop.xlane.xlu0 %500
      %v502 = vadd.f32 %v490, %v492
      %503 = vadd.xlane.f32.xlu0 %v502
      %v504 = vpop.xlane.xlu0 %503
      %v505 = vrcp.pop %v495
      %v506 = vmul.f32 1.0, %v505
      %v507 = vrcp.pop %v498
      %v508 = vmul.f32 1.0, %v507
      %v509 = vrcp.pop %v501
      %v510 = vmul.f32 1.0, %v509
      %v511 = vrcp.pop %v504
      %v512 = vmul.f32 1.0, %v511
      %v513 = vmul.f32 %v478, %v506
      %v514 = vmul.f32 %v480, %v506
      %v515 = vmul.f32 %v482, %v508
      %v516 = vmul.f32 %v484, %v508
      %v517 = vmul.f32 %v486, %v510
      %v518 = vmul.f32 %v488, %v510
      %v519 = vmul.f32 %v490, %v512
      %v520 = vmul.f32 %v492, %v512
      %521 = vxpose.xlu0.b32.start [1/16] %v187, 128
      %522 = vxpose.xlu0.b32.cont [2/16] %v188, 128
      %523 = vxpose.xlu0.b32.cont [3/16] %v189, 128
      %524 = vxpose.xlu0.b32.cont [4/16] %v190, 128
      %525 = vxpose.xlu0.b32.cont [5/16] %v191, 128
      %526 = vxpose.xlu0.b32.cont [6/16] %v192, 128
      %527 = vxpose.xlu0.b32.cont [7/16] %v193, 128
      %528 = vxpose.xlu0.b32.cont [8/16] %v194, 128
      %529 = vxpose.xlu0.b32.cont [9/16] %v195, 128
      %530 = vxpose.xlu0.b32.cont [10/16] %v196, 128
      %531 = vxpose.xlu0.b32.cont [11/16] %v197, 128
      %532 = vxpose.xlu0.b32.cont [12/16] %v198, 128
      %533 = vxpose.xlu0.b32.cont [13/16] %v199, 128
      %534 = vxpose.xlu0.b32.cont [14/16] %v200, 128
      %535 = vxpose.xlu0.b32.cont [15/16] %v201, 128
      %536 = vxpose.xlu0.b32.end [16/16] %v202, 128
      %v537 = vpop.trf.xlu0
      %v538 = vpop.trf.xlu0
      %v539 = vpop.trf.xlu0
      %v540 = vpop.trf.xlu0
      %v541 = vpop.trf.xlu0
      %v542 = vpop.trf.xlu0
      %v543 = vpop.trf.xlu0
      %v544 = vpop.trf.xlu0
      %v545 = vpop.trf.xlu0
      %v546 = vpop.trf.xlu0
      %v547 = vpop.trf.xlu0
      %v548 = vpop.trf.xlu0
      %v549 = vpop.trf.xlu0
      %v550 = vpop.trf.xlu0
      %v551 = vpop.trf.xlu0
      %v552 = vpop.trf.xlu0
      %553 = vxpose.xlu0.b32.start [1/16] %v203, 128
      %554 = vxpose.xlu0.b32.cont [2/16] %v204, 128
      %555 = vxpose.xlu0.b32.cont [3/16] %v205, 128
      %556 = vxpose.xlu0.b32.cont [4/16] %v206, 128
      %557 = vxpose.xlu0.b32.cont [5/16] %v207, 128
      %558 = vxpose.xlu0.b32.cont [6/16] %v208, 128
      %559 = vxpose.xlu0.b32.cont [7/16] %v209, 128
      %560 = vxpose.xlu0.b32.cont [8/16] %v210, 128
      %561 = vxpose.xlu0.b32.cont [9/16] %v211, 128
      %562 = vxpose.xlu0.b32.cont [10/16] %v212, 128
      %563 = vxpose.xlu0.b32.cont [11/16] %v213, 128
      %564 = vxpose.xlu0.b32.cont [12/16] %v214, 128
      %565 = vxpose.xlu0.b32.cont [13/16] %v215, 128
      %566 = vxpose.xlu0.b32.cont [14/16] %v216, 128
      %567 = vxpose.xlu0.b32.cont [15/16] %v217, 128
      %568 = vxpose.xlu0.b32.end [16/16] %v218, 128
      %v569 = vpop.trf.xlu0
      %v570 = vpop.trf.xlu0
      %v571 = vpop.trf.xlu0
      %v572 = vpop.trf.xlu0
      %v573 = vpop.trf.xlu0
      %v574 = vpop.trf.xlu0
      %v575 = vpop.trf.xlu0
      %v576 = vpop.trf.xlu0
      %v577 = vpop.trf.xlu0
      %v578 = vpop.trf.xlu0
      %v579 = vpop.trf.xlu0
      %v580 = vpop.trf.xlu0
      %v581 = vpop.trf.xlu0
      %v582 = vpop.trf.xlu0
      %v583 = vpop.trf.xlu0
      %v584 = vpop.trf.xlu0
      %585 = vmatprep.subr.mxu0 %v514
      %586 = vmatpush1.xpose.msra.mxu0 %v513
      %587 = vmatprep.subr.mxu0 %v516
      %588 = vmatpush1.xpose.msra.mxu0 %v515
      %589 = vmatprep.subr.mxu0 %v518
      %590 = vmatpush1.xpose.msra.mxu0 %v517
      %591 = vmatprep.subr.mxu0 %v520
      %592 = vmatpush1.xpose.msra.mxu0 %v519
      %593 = vmatprep.subr.mxu0 0.0
      %594 = vmatpush1.xpose.msra.mxu0 0.0
      %595 = vmatprep.subr.mxu0 0.0
      %596 = vmatpush1.xpose.msra.mxu0 0.0
      %597 = vmatprep.subr.mxu0 0.0
      %598 = vmatpush1.xpose.msra.mxu0 0.0
      %599 = vmatprep.subr.mxu0 0.0
      %600 = vmatpush1.xpose.msra.mxu0 0.0
      %601 = vmatprep.subr.mxu0 0.0
      %602 = vmatpush1.xpose.msra.mxu0 0.0
      %603 = vmatprep.subr.mxu0 0.0
      %604 = vmatpush1.xpose.msra.mxu0 0.0
      %605 = vmatprep.subr.mxu0 0.0
      %606 = vmatpush1.xpose.msra.mxu0 0.0
      %607 = vmatprep.subr.mxu0 0.0
      %608 = vmatpush1.xpose.msra.mxu0 0.0
      %609 = vmatprep.subr.mxu0 0.0
      %610 = vmatpush1.xpose.msra.mxu0 0.0
      %611 = vmatprep.subr.mxu0 0.0
      %612 = vmatpush1.xpose.msra.mxu0 0.0
      %613 = vmatprep.subr.mxu0 0.0
      %614 = vmatpush1.xpose.msra.mxu0 0.0
      %615 = vmatprep.subr.mxu0 0.0
      %616 = vmatpush1.xpose.msra.mxu0 0.0
      %617 = vmatprep.subr.mxu0 0.0
      %618 = vmatpush1.xpose.msra.mxu0 0.0
      %619 = vmatprep.subr.mxu0 0.0
      %620 = vmatpush1.xpose.msra.mxu0 0.0
      %621 = vmatprep.subr.mxu0 0.0
      %622 = vmatpush1.xpose.msra.mxu0 0.0
      %623 = vmatprep.subr.mxu0 0.0
      %624 = vmatpush1.xpose.msra.mxu0 0.0
      %625 = vmatprep.subr.mxu0 0.0
      %626 = vmatpush1.xpose.msra.mxu0 0.0
      %627 = vmatprep.subr.mxu0 0.0
      %628 = vmatpush1.xpose.msra.mxu0 0.0
      %629 = vmatprep.subr.mxu0 0.0
      %630 = vmatpush1.xpose.msra.mxu0 0.0
      %631 = vmatprep.subr.mxu0 0.0
      %632 = vmatpush1.xpose.msra.mxu0 0.0
      %633 = vmatprep.subr.mxu0 0.0
      %634 = vmatpush1.xpose.msra.mxu0 0.0
      %635 = vmatprep.subr.mxu0 0.0
      %636 = vmatpush1.xpose.msra.mxu0 0.0
      %637 = vmatprep.subr.mxu0 0.0
      %638 = vmatpush1.xpose.msra.mxu0 0.0
      %639 = vmatprep.subr.mxu0 0.0
      %640 = vmatpush1.xpose.msra.mxu0 0.0
      %641 = vmatprep.subr.mxu0 0.0
      %642 = vmatpush1.xpose.msra.mxu0 0.0
      %643 = vmatprep.subr.mxu0 0.0
      %644 = vmatpush1.xpose.msra.mxu0 0.0
      %645 = vmatprep.subr.mxu0 0.0
      %646 = vmatpush1.xpose.msra.mxu0 0.0
      %647 = vmatprep.subr.mxu0 0.0
      %648 = vmatpush1.xpose.msra.mxu0 0.0
      %649 = vmatprep.mubr.f32.mxu0 %v569
      %650 = vmatmul.mubr.f32.gmra.mrb[0].mxu0 %v537
      %v651 = vpop.f32.mrb[0].mxu0
      %v652 = vadd.f32 0.0, %v651
      %v653 = vpop.f32.mrb[0].mxu0
      %654 = vmatprep.mubr.f32.mxu0 %v570
      %655 = vmatmul.mubr.f32.gmra.mrb[0].mxu0 %v538
      %v656 = vpop.f32.mrb[0].mxu0
      %v657 = vadd.f32 0.0, %v656
      %v658 = vpop.f32.mrb[0].mxu0
      %659 = vmatprep.mubr.f32.mxu0 %v571
      %660 = vmatmul.mubr.f32.gmra.mrb[0].mxu0 %v539
      %v661 = vpop.f32.mrb[0].mxu0
      %v662 = vadd.f32 0.0, %v661
      %v663 = vpop.f32.mrb[0].mxu0
      %664 = vmatprep.mubr.f32.mxu0 %v572
      %665 = vmatmul.mubr.f32.gmra.mrb[0].mxu0 %v540
      %v666 = vpop.f32.mrb[0].mxu0
      %v667 = vadd.f32 0.0, %v666
      %v668 = vpop.f32.mrb[0].mxu0
      %669 = vdwg.mxu0
      %v670 = vmul.u32 %v186, 2
      %vm671 = vcmp.eq.s32.totalorder %v177, %v670
      %vm672 = vcmp.eq.s32.totalorder %v178, %v670
      %vm673 = vcmp.eq.s32.totalorder %v179, %v670
      %vm674 = vcmp.eq.s32.totalorder %v180, %v670
      %vm675 = vcmp.eq.s32.totalorder %v181, %v670
      %vm676 = vcmp.eq.s32.totalorder %v182, %v670
      %vm677 = vcmp.eq.s32.totalorder %v183, %v670
      %vm678 = vcmp.eq.s32.totalorder %v184, %v670
      %v679 = vsel %vm671, 1, 0
      %v680 = vsel %vm672, 1, 0
      %v681 = vsel %vm673, 1, 0
      %v682 = vsel %vm674, 1, 0
      %v683 = vsel %vm675, 1, 0
      %v684 = vsel %vm676, 1, 0
      %v685 = vsel %vm677, 1, 0
      %v686 = vsel %vm678, 1, 0
      %v687 = vcvt.s32.f32 %v679
      %v688 = vcvt.s32.f32 %v680
      %v689 = vcvt.s32.f32 %v681
      %v690 = vcvt.s32.f32 %v682
      %v691 = vcvt.s32.f32 %v683
      %v692 = vcvt.s32.f32 %v684
      %v693 = vcvt.s32.f32 %v685
      %v694 = vcvt.s32.f32 %v686
      %v695 = vld [vmem:[%s165 + $0x20] sm:$0xff]
      %v696 = vld [vmem:[%s165 + $0x28] sm:$0xff]
      %v697 = vld [vmem:[%s165 + $0x30] sm:$0xff]
      %v698 = vld [vmem:[%s165 + $0x38] sm:$0xff]
      %v699 = vmul.f32 %v695, 0.5
      %v700 = vmul.f32 %v696, 0.5
      %v701 = vmul.f32 %v697, 0.5
      %v702 = vmul.f32 %v698, 0.5
      %v704 = vsel %vm219, %v699, 0
      %v707 = vsel %vm219, %v700, 0
      %v710 = vsel %vm219, %v701, 0
      %v713 = vsel %vm219, %v702, 0
      %715 = vmatprep.subr.mxu0 0.0
      %716 = vmatpush1.xpose.msra.mxu0 %v273
      %717 = vmatprep.subr.mxu0 0.0
      %718 = vmatpush1.xpose.msra.mxu0 %v276
      %719 = vmatprep.subr.mxu0 0.0
      %720 = vmatpush1.xpose.msra.mxu0 %v279
      %721 = vmatprep.subr.mxu0 0.0
      %722 = vmatpush1.xpose.msra.mxu0 %v282
      %723 = vmatprep.subr.mxu0 0.0
      %724 = vmatpush1.xpose.msra.mxu0 %v285
      %725 = vmatprep.subr.mxu0 0.0
      %726 = vmatpush1.xpose.msra.mxu0 %v288
      %727 = vmatprep.subr.mxu0 0.0
      %728 = vmatpush1.xpose.msra.mxu0 %v291
      %729 = vmatprep.subr.mxu0 0.0
      %730 = vmatpush1.xpose.msra.mxu0 %v294
      %731 = vmatprep.subr.mxu0 0.0
      %732 = vmatpush1.xpose.msra.mxu0 %v297
      %733 = vmatprep.subr.mxu0 0.0
      %734 = vmatpush1.xpose.msra.mxu0 %v300
      %735 = vmatprep.subr.mxu0 0.0
      %736 = vmatpush1.xpose.msra.mxu0 %v303
      %737 = vmatprep.subr.mxu0 0.0
      %738 = vmatpush1.xpose.msra.mxu0 %v306
      %739 = vmatprep.subr.mxu0 0.0
      %740 = vmatpush1.xpose.msra.mxu0 %v309
      %741 = vmatprep.subr.mxu0 0.0
      %742 = vmatpush1.xpose.msra.mxu0 %v312
      %743 = vmatprep.subr.mxu0 0.0
      %744 = vmatpush1.xpose.msra.mxu0 %v315
      %745 = vmatprep.subr.mxu0 0.0
      %746 = vmatpush1.xpose.msra.mxu0 %v318
      %747 = vmatprep.subr.mxu0 0.0
      %748 = vmatpush1.xpose.msra.mxu0 %v321
      %749 = vmatprep.subr.mxu0 0.0
      %750 = vmatpush1.xpose.msra.mxu0 %v324
      %751 = vmatprep.subr.mxu0 0.0
      %752 = vmatpush1.xpose.msra.mxu0 %v327
      %753 = vmatprep.subr.mxu0 0.0
      %754 = vmatpush1.xpose.msra.mxu0 %v330
      %755 = vmatprep.subr.mxu0 0.0
      %756 = vmatpush1.xpose.msra.mxu0 %v333
      %757 = vmatprep.subr.mxu0 0.0
      %758 = vmatpush1.xpose.msra.mxu0 %v336
      %759 = vmatprep.subr.mxu0 0.0
      %760 = vmatpush1.xpose.msra.mxu0 %v339
      %761 = vmatprep.subr.mxu0 0.0
      %762 = vmatpush1.xpose.msra.mxu0 %v342
      %763 = vmatprep.subr.mxu0 0.0
      %764 = vmatpush1.xpose.msra.mxu0 %v345
      %765 = vmatprep.subr.mxu0 0.0
      %766 = vmatpush1.xpose.msra.mxu0 %v348
      %767 = vmatprep.subr.mxu0 0.0
      %768 = vmatpush1.xpose.msra.mxu0 %v351
      %769 = vmatprep.subr.mxu0 0.0
      %770 = vmatpush1.xpose.msra.mxu0 %v354
      %771 = vmatprep.subr.mxu0 0.0
      %772 = vmatpush1.xpose.msra.mxu0 %v357
      %773 = vmatprep.subr.mxu0 0.0
      %774 = vmatpush1.xpose.msra.mxu0 %v360
      %775 = vmatprep.subr.mxu0 0.0
      %776 = vmatpush1.xpose.msra.mxu0 %v363
      %777 = vmatprep.subr.mxu0 0.0
      %778 = vmatpush1.xpose.msra.mxu0 %v366
      %779 = vmatprep.mubr.f32.mxu0 0.0
      %780 = vmatmul.mubr.f32.gmra.mrb[0].mxu0 %v704
      %v781 = vpop.f32.mrb[0].mxu0
      %v782 = vadd.f32 0.0, %v781
      %v783 = vpop.f32.mrb[0].mxu0
      %v784 = vadd.f32 0.0, %v783
      %785 = vmatprep.mubr.f32.mxu0 0.0
      %786 = vmatmul.mubr.f32.gmra.mrb[0].mxu0 %v707
      %v787 = vpop.f32.mrb[0].mxu0
      %v788 = vadd.f32 0.0, %v787
      %v789 = vpop.f32.mrb[0].mxu0
      %v790 = vadd.f32 0.0, %v789
      %791 = vmatprep.mubr.f32.mxu0 0.0
      %792 = vmatmul.mubr.f32.gmra.mrb[0].mxu0 %v710
      %v793 = vpop.f32.mrb[0].mxu0
      %v794 = vadd.f32 0.0, %v793
      %v795 = vpop.f32.mrb[0].mxu0
      %v796 = vadd.f32 0.0, %v795
      %797 = vmatprep.mubr.f32.mxu0 0.0
      %798 = vmatmul.mubr.f32.gmra.mrb[0].mxu0 %v713
      %v799 = vpop.f32.mrb[0].mxu0
      %v800 = vadd.f32 0.0, %v799
      %v801 = vpop.f32.mrb[0].mxu0
      %v802 = vadd.f32 0.0, %v801
      %803 = vdwg.mxu0
      %v804 = vmax.f32 %v782, %v784
      %805 = vmax.xlane.f32.xlu0 %v804
      %v806 = vpop.xlane.xlu0 %805
      %v807 = vmax.f32 %v788, %v790
      %808 = vmax.xlane.f32.xlu0 %v807
      %v809 = vpop.xlane.xlu0 %808
      %v810 = vmax.f32 %v794, %v796
      %811 = vmax.xlane.f32.xlu0 %v810
      %v812 = vpop.xlane.xlu0 %811
      %v813 = vmax.f32 %v800, %v802
      %814 = vmax.xlane.f32.xlu0 %v813
      %v815 = vpop.xlane.xlu0 %814
      %v816 = vsub.f32 %v782, %v806
      %v817 = vsub.f32 %v784, %v806
      %v818 = vsub.f32 %v788, %v809
      %v819 = vsub.f32 %v790, %v809
      %v820 = vsub.f32 %v794, %v812
      %v821 = vsub.f32 %v796, %v812
      %v822 = vsub.f32 %v800, %v815
      %v823 = vsub.f32 %v802, %v815
      %v824 = vmul.f32 %v816, 1.442695
      %v825 = vpow.pop %v824
      %v826 = vmul.f32 %v817, 1.442695
      %v827 = vpow.pop %v826
      %v828 = vmul.f32 %v818, 1.442695
      %v829 = vpow.pop %v828
      %v830 = vmul.f32 %v819, 1.442695
      %v831 = vpow.pop %v830
      %v832 = vmul.f32 %v820, 1.442695
      %v833 = vpow.pop %v832
      %v834 = vmul.f32 %v821, 1.442695
      %v835 = vpow.pop %v834
      %v836 = vmul.f32 %v822, 1.442695
      %v837 = vpow.pop %v836
      %v838 = vmul.f32 %v823, 1.442695
      %v839 = vpow.pop %v838
      %v840 = vadd.f32 %v825, %v827
      %841 = vadd.xlane.f32.xlu0 %v840
      %v842 = vpop.xlane.xlu0 %841
      %v843 = vadd.f32 %v829, %v831
      %844 = vadd.xlane.f32.xlu0 %v843
      %v845 = vpop.xlane.xlu0 %844
      %v846 = vadd.f32 %v833, %v835
      %847 = vadd.xlane.f32.xlu0 %v846
      %v848 = vpop.xlane.xlu0 %847
      %v849 = vadd.f32 %v837, %v839
      %850 = vadd.xlane.f32.xlu0 %v849
      %v851 = vpop.xlane.xlu0 %850
      %v852 = vrcp.pop %v842
      %v853 = vmul.f32 1.0, %v852
      %v854 = vrcp.pop %v845
      %v855 = vmul.f32 1.0, %v854
      %v856 = vrcp.pop %v848
      %v857 = vmul.f32 1.0, %v856
      %v858 = vrcp.pop %v851
      %v859 = vmul.f32 1.0, %v858
      %v860 = vmul.f32 %v825, %v853
      %v861 = vmul.f32 %v827, %v853
      %v862 = vmul.f32 %v829, %v855
      %v863 = vmul.f32 %v831, %v855
      %v864 = vmul.f32 %v833, %v857
      %v865 = vmul.f32 %v835, %v857
      %v866 = vmul.f32 %v837, %v859
      %v867 = vmul.f32 %v839, %v859
      %868 = vmatprep.subr.mxu0 %v861
      %869 = vmatpush1.xpose.msra.mxu0 %v860
      %870 = vmatprep.subr.mxu0 %v863
      %871 = vmatpush1.xpose.msra.mxu0 %v862
      %872 = vmatprep.subr.mxu0 %v865
      %873 = vmatpush1.xpose.msra.mxu0 %v864
      %874 = vmatprep.subr.mxu0 %v867
      %875 = vmatpush1.xpose.msra.mxu0 %v866
      %876 = vmatprep.subr.mxu0 0.0
      %877 = vmatpush1.xpose.msra.mxu0 0.0
      %878 = vmatprep.subr.mxu0 0.0
      %879 = vmatpush1.xpose.msra.mxu0 0.0
      %880 = vmatprep.subr.mxu0 0.0
      %881 = vmatpush1.xpose.msra.mxu0 0.0
      %882 = vmatprep.subr.mxu0 0.0
      %883 = vmatpush1.xpose.msra.mxu0 0.0
      %884 = vmatprep.subr.mxu0 0.0
      %885 = vmatpush1.xpose.msra.mxu0 0.0
      %886 = vmatprep.subr.mxu0 0.0
      %887 = vmatpush1.xpose.msra.mxu0 0.0
      %888 = vmatprep.subr.mxu0 0.0
      %889 = vmatpush1.xpose.msra.mxu0 0.0
      %890 = vmatprep.subr.mxu0 0.0
      %891 = vmatpush1.xpose.msra.mxu0 0.0
      %892 = vmatprep.subr.mxu0 0.0
      %893 = vmatpush1.xpose.msra.mxu0 0.0
      %894 = vmatprep.subr.mxu0 0.0
      %895 = vmatpush1.xpose.msra.mxu0 0.0
      %896 = vmatprep.subr.mxu0 0.0
      %897 = vmatpush1.xpose.msra.mxu0 0.0
      %898 = vmatprep.subr.mxu0 0.0
      %899 = vmatpush1.xpose.msra.mxu0 0.0
      %900 = vmatprep.subr.mxu0 0.0
      %901 = vmatpush1.xpose.msra.mxu0 0.0
      %902 = vmatprep.subr.mxu0 0.0
      %903 = vmatpush1.xpose.msra.mxu0 0.0
      %904 = vmatprep.subr.mxu0 0.0
      %905 = vmatpush1.xpose.msra.mxu0 0.0
      %906 = vmatprep.subr.mxu0 0.0
      %907 = vmatpush1.xpose.msra.mxu0 0.0
      %908 = vmatprep.subr.mxu0 0.0
      %909 = vmatpush1.xpose.msra.mxu0 0.0
      %910 = vmatprep.subr.mxu0 0.0
      %911 = vmatpush1.xpose.msra.mxu0 0.0
      %912 = vmatprep.subr.mxu0 0.0
      %913 = vmatpush1.xpose.msra.mxu0 0.0
      %914 = vmatprep.subr.mxu0 0.0
      %915 = vmatpush1.xpose.msra.mxu0 0.0
      %916 = vmatprep.subr.mxu0 0.0
      %917 = vmatpush1.xpose.msra.mxu0 0.0
      %918 = vmatprep.subr.mxu0 0.0
      %919 = vmatpush1.xpose.msra.mxu0 0.0
      %920 = vmatprep.subr.mxu0 0.0
      %921 = vmatpush1.xpose.msra.mxu0 0.0
      %922 = vmatprep.subr.mxu0 0.0
      %923 = vmatpush1.xpose.msra.mxu0 0.0
      %924 = vmatprep.subr.mxu0 0.0
      %925 = vmatpush1.xpose.msra.mxu0 0.0
      %926 = vmatprep.subr.mxu0 0.0
      %927 = vmatpush1.xpose.msra.mxu0 0.0
      %928 = vmatprep.subr.mxu0 0.0
      %929 = vmatpush1.xpose.msra.mxu0 0.0
      %930 = vmatprep.subr.mxu0 0.0
      %931 = vmatpush1.xpose.msra.mxu0 0.0
      %932 = vmatprep.mubr.f32.mxu0 %v569
      %933 = vmatmul.mubr.f32.gmra.mrb[0].mxu0 %v537
      %v934 = vpop.f32.mrb[0].mxu0
      %v935 = vadd.f32 0.0, %v934
      %v936 = vpop.f32.mrb[0].mxu0
      %937 = vmatprep.mubr.f32.mxu0 %v570
      %938 = vmatmul.mubr.f32.gmra.mrb[0].mxu0 %v538
      %v939 = vpop.f32.mrb[0].mxu0
      %v940 = vadd.f32 0.0, %v939
      %v941 = vpop.f32.mrb[0].mxu0
      %942 = vmatprep.mubr.f32.mxu0 %v571
      %943 = vmatmul.mubr.f32.gmra.mrb[0].mxu0 %v539
      %v944 = vpop.f32.mrb[0].mxu0
      %v945 = vadd.f32 0.0, %v944
      %v946 = vpop.f32.mrb[0].mxu0
      %947 = vmatprep.mubr.f32.mxu0 %v572
      %948 = vmatmul.mubr.f32.gmra.mrb[0].mxu0 %v540
      %v949 = vpop.f32.mrb[0].mxu0
      %v950 = vadd.f32 0.0, %v949
      %v951 = vpop.f32.mrb[0].mxu0
      %952 = vdwg.mxu0
      %v953 = vadd.s32 %v670, 1
      %vm954 = vcmp.eq.s32.totalorder %v177, %v953
      %vm955 = vcmp.eq.s32.totalorder %v178, %v953
      %vm956 = vcmp.eq.s32.totalorder %v179, %v953
      %vm957 = vcmp.eq.s32.totalorder %v180, %v953
      %vm958 = vcmp.eq.s32.totalorder %v181, %v953
      %vm959 = vcmp.eq.s32.totalorder %v182, %v953
      %vm960 = vcmp.eq.s32.totalorder %v183, %v953
      %vm961 = vcmp.eq.s32.totalorder %v184, %v953
      %v962 = vsel %vm954, 1, 0
      %v963 = vsel %vm955, 1, 0
      %v964 = vsel %vm956, 1, 0
      %v965 = vsel %vm957, 1, 0
      %v966 = vsel %vm958, 1, 0
      %v967 = vsel %vm959, 1, 0
      %v968 = vsel %vm960, 1, 0
      %v969 = vsel %vm961, 1, 0
      %v970 = vcvt.s32.f32 %v962
      %v971 = vcvt.s32.f32 %v963
      %v972 = vcvt.s32.f32 %v964
      %v973 = vcvt.s32.f32 %v965
      %v974 = vcvt.s32.f32 %v966
      %v975 = vcvt.s32.f32 %v967
      %v976 = vcvt.s32.f32 %v968
      %v977 = vcvt.s32.f32 %v969
      %v979 = vsel %vm219, %v970, 0
      %v982 = vsel %vm219, %v971, 0
      %v985 = vsel %vm219, %v972, 0
      %v988 = vsel %vm219, %v973, 0
      %v991 = vsel %vm219, %v974, 0
      %v994 = vsel %vm219, %v975, 0
      %v997 = vsel %vm219, %v976, 0
      %v1000 = vsel %vm219, %v977, 0
      %1002 = vmatprep.subr.mxu0 0.0
      %1003 = vmatpush1.msra.mxu0 %v935
      %1004 = vmatprep.subr.mxu0 0.0
      %1005 = vmatpush1.msra.mxu0 %v940
      %1006 = vmatprep.subr.mxu0 0.0
      %1007 = vmatpush1.msra.mxu0 %v945
      %1008 = vmatprep.subr.mxu0 0.0
      %1009 = vmatpush1.msra.mxu0 %v950
      %1010 = vmatprep.subr.mxu0 0.0
      %1011 = vmatpush1.msra.mxu0 0.0
      %1012 = vmatprep.subr.mxu0 0.0
      %1013 = vmatpush1.msra.mxu0 0.0
      %1014 = vmatprep.subr.mxu0 0.0
      %1015 = vmatpush1.msra.mxu0 0.0
      %1016 = vmatprep.subr.mxu0 0.0
      %1017 = vmatpush1.msra.mxu0 0.0
      %1018 = vmatprep.subr.mxu0 0.0
      %1019 = vmatpush1.msra.mxu0 0.0
      %1020 = vmatprep.subr.mxu0 0.0
      %1021 = vmatpush1.msra.mxu0 0.0
      %1022 = vmatprep.subr.mxu0 0.0
      %1023 = vmatpush1.msra.mxu0 0.0
      %1024 = vmatprep.subr.mxu0 0.0
      %1025 = vmatpush1.msra.mxu0 0.0
      %1026 = vmatprep.subr.mxu0 0.0
      %1027 = vmatpush1.msra.mxu0 0.0
      %1028 = vmatprep.subr.mxu0 0.0
      %1029 = vmatpush1.msra.mxu0 0.0
      %1030 = vmatprep.subr.mxu0 0.0
      %1031 = vmatpush1.msra.mxu0 0.0
      %1032 = vmatprep.subr.mxu0 0.0
      %1033 = vmatpush1.msra.mxu0 0.0
      %1034 = vmatprep.subr.mxu0 0.0
      %1035 = vmatpush1.msra.mxu0 0.0
      %1036 = vmatprep.subr.mxu0 0.0
      %1037 = vmatpush1.msra.mxu0 0.0
      %1038 = vmatprep.subr.mxu0 0.0
      %1039 = vmatpush1.msra.mxu0 0.0
      %1040 = vmatprep.subr.mxu0 0.0
      %1041 = vmatpush1.msra.mxu0 0.0
      %1042 = vmatprep.subr.mxu0 0.0
      %1043 = vmatpush1.msra.mxu0 0.0
      %1044 = vmatprep.subr.mxu0 0.0
      %1045 = vmatpush1.msra.mxu0 0.0
      %1046 = vmatprep.subr.mxu0 0.0
      %1047 = vmatpush1.msra.mxu0 0.0
      %1048 = vmatprep.subr.mxu0 0.0
      %1049 = vmatpush1.msra.mxu0 0.0
      %1050 = vmatprep.subr.mxu0 0.0
      %1051 = vmatpush1.msra.mxu0 0.0
      %1052 = vmatprep.subr.mxu0 0.0
      %1053 = vmatpush1.msra.mxu0 0.0
      %1054 = vmatprep.subr.mxu0 0.0
      %1055 = vmatpush1.msra.mxu0 0.0
      %1056 = vmatprep.subr.mxu0 0.0
      %1057 = vmatpush1.msra.mxu0 0.0
      %1058 = vmatprep.subr.mxu0 0.0
      %1059 = vmatpush1.msra.mxu0 0.0
      %1060 = vmatprep.subr.mxu0 0.0
      %1061 = vmatpush1.msra.mxu0 0.0
      %1062 = vmatprep.subr.mxu0 0.0
      %1063 = vmatpush1.msra.mxu0 0.0
      %1064 = vmatprep.subr.mxu0 0.0
      %1065 = vmatpush1.msra.mxu0 0.0
      %1066 = vmatprep.mubr.f32.mxu0 0.0
      %1067 = vmatmul.mubr.f32.gmra.mrb[0].mxu0 %v979
      %v1068 = vpop.f32.mrb[0].mxu0
      %v1069 = vadd.f32 0.0, %v1068
      %v1070 = vpop.f32.mrb[0].mxu0
      %1071 = vmatprep.mubr.f32.mxu0 0.0
      %1072 = vmatmul.mubr.f32.gmra.mrb[0].mxu0 %v982
      %v1073 = vpop.f32.mrb[0].mxu0
      %v1074 = vadd.f32 0.0, %v1073
      %v1075 = vpop.f32.mrb[0].mxu0
      %1076 = vmatprep.mubr.f32.mxu0 0.0
      %1077 = vmatmul.mubr.f32.gmra.mrb[0].mxu0 %v985
      %v1078 = vpop.f32.mrb[0].mxu0
      %v1079 = vadd.f32 0.0, %v1078
      %v1080 = vpop.f32.mrb[0].mxu0
      %1081 = vmatprep.mubr.f32.mxu0 0.0
      %1082 = vmatmul.mubr.f32.gmra.mrb[0].mxu0 %v988
      %v1083 = vpop.f32.mrb[0].mxu0
      %v1084 = vadd.f32 0.0, %v1083
      %v1085 = vpop.f32.mrb[0].mxu0
      %1086 = vmatprep.mubr.f32.mxu0 0.0
      %1087 = vmatmul.mubr.f32.gmra.mrb[0].mxu0 %v991
      %v1088 = vpop.f32.mrb[0].mxu0
      %v1089 = vadd.f32 0.0, %v1088
      %v1090 = vpop.f32.mrb[0].mxu0
      %1091 = vmatprep.mubr.f32.mxu0 0.0
      %1092 = vmatmul.mubr.f32.gmra.mrb[0].mxu0 %v994
      %v1093 = vpop.f32.mrb[0].mxu0
      %v1094 = vadd.f32 0.0, %v1093
      %v1095 = vpop.f32.mrb[0].mxu0
      %1096 = vmatprep.mubr.f32.mxu0 0.0
      %1097 = vmatmul.mubr.f32.gmra.mrb[0].mxu0 %v997
      %v1098 = vpop.f32.mrb[0].mxu0
      %v1099 = vadd.f32 0.0, %v1098
      %v1100 = vpop.f32.mrb[0].mxu0
      %1101 = vmatprep.mubr.f32.mxu0 0.0
      %1102 = vmatmul.mubr.f32.gmra.mrb[0].mxu0 %v1000
      %v1103 = vpop.f32.mrb[0].mxu0
      %v1104 = vadd.f32 0.0, %v1103
      %v1105 = vpop.f32.mrb[0].mxu0
      %1106 = vdwg.mxu0
      %v1108 = vsel %vm219, %v687, 0
      %v1111 = vsel %vm219, %v688, 0
      %v1114 = vsel %vm219, %v689, 0
      %v1117 = vsel %vm219, %v690, 0
      %v1120 = vsel %vm219, %v691, 0
      %v1123 = vsel %vm219, %v692, 0
      %v1126 = vsel %vm219, %v693, 0
      %v1129 = vsel %vm219, %v694, 0
      %1131 = vmatprep.subr.mxu0 0.0
      %1132 = vmatpush1.msra.mxu0 %v652
      %1133 = vmatprep.subr.mxu0 0.0
      %1134 = vmatpush1.msra.mxu0 %v657
      %1135 = vmatprep.subr.mxu0 0.0
      %1136 = vmatpush1.msra.mxu0 %v662
      %1137 = vmatprep.subr.mxu0 0.0
      %1138 = vmatpush1.msra.mxu0 %v667
      %1139 = vmatprep.subr.mxu0 0.0
      %1140 = vmatpush1.msra.mxu0 0.0
      %1141 = vmatprep.subr.mxu0 0.0
      %1142 = vmatpush1.msra.mxu0 0.0
      %1143 = vmatprep.subr.mxu0 0.0
      %1144 = vmatpush1.msra.mxu0 0.0
      %1145 = vmatprep.subr.mxu0 0.0
      %1146 = vmatpush1.msra.mxu0 0.0
      %1147 = vmatprep.subr.mxu0 0.0
      %1148 = vmatpush1.msra.mxu0 0.0
      %1149 = vmatprep.subr.mxu0 0.0
      %1150 = vmatpush1.msra.mxu0 0.0
      %1151 = vmatprep.subr.mxu0 0.0
      %1152 = vmatpush1.msra.mxu0 0.0
      %1153 = vmatprep.subr.mxu0 0.0
      %1154 = vmatpush1.msra.mxu0 0.0
      %1155 = vmatprep.subr.mxu0 0.0
      %1156 = vmatpush1.msra.mxu0 0.0
      %1157 = vmatprep.subr.mxu0 0.0
      %1158 = vmatpush1.msra.mxu0 0.0
      %1159 = vmatprep.subr.mxu0 0.0
      %1160 = vmatpush1.msra.mxu0 0.0
      %1161 = vmatprep.subr.mxu0 0.0
      %1162 = vmatpush1.msra.mxu0 0.0
      %1163 = vmatprep.subr.mxu0 0.0
      %1164 = vmatpush1.msra.mxu0 0.0
      %1165 = vmatprep.subr.mxu0 0.0
      %1166 = vmatpush1.msra.mxu0 0.0
      %1167 = vmatprep.subr.mxu0 0.0
      %1168 = vmatpush1.msra.mxu0 0.0
      %1169 = vmatprep.subr.mxu0 0.0
      %1170 = vmatpush1.msra.mxu0 0.0
      %1171 = vmatprep.subr.mxu0 0.0
      %1172 = vmatpush1.msra.mxu0 0.0
      %1173 = vmatprep.subr.mxu0 0.0
      %1174 = vmatpush1.msra.mxu0 0.0
      %1175 = vmatprep.subr.mxu0 0.0
      %1176 = vmatpush1.msra.mxu0 0.0
      %1177 = vmatprep.subr.mxu0 0.0
      %1178 = vmatpush1.msra.mxu0 0.0
      %1179 = vmatprep.subr.mxu0 0.0
      %1180 = vmatpush1.msra.mxu0 0.0
      %1181 = vmatprep.subr.mxu0 0.0
      %1182 = vmatpush1.msra.mxu0 0.0
      %1183 = vmatprep.subr.mxu0 0.0
      %1184 = vmatpush1.msra.mxu0 0.0
      %1185 = vmatprep.subr.mxu0 0.0
      %1186 = vmatpush1.msra.mxu0 0.0
      %1187 = vmatprep.subr.mxu0 0.0
      %1188 = vmatpush1.msra.mxu0 0.0
      %1189 = vmatprep.subr.mxu0 0.0
      %1190 = vmatpush1.msra.mxu0 0.0
      %1191 = vmatprep.subr.mxu0 0.0
      %1192 = vmatpush1.msra.mxu0 0.0
      %1193 = vmatprep.subr.mxu0 0.0
      %1194 = vmatpush1.msra.mxu0 0.0
      %1195 = vmatprep.mubr.f32.mxu0 0.0
      %1196 = vmatmul.mubr.f32.gmra.mrb[0].mxu0 %v1108
      %v1197 = vpop.f32.mrb[0].mxu0
      %v1198 = vadd.f32 %v1069, %v1197
      %v1199 = vpop.f32.mrb[0].mxu0
      %1200 = vmatprep.mubr.f32.mxu0 0.0
      %1201 = vmatmul.mubr.f32.gmra.mrb[0].mxu0 %v1111
      %v1202 = vpop.f32.mrb[0].mxu0
      %v1203 = vadd.f32 %v1074, %v1202
      %v1204 = vpop.f32.mrb[0].mxu0
      %1205 = vmatprep.mubr.f32.mxu0 0.0
      %1206 = vmatmul.mubr.f32.gmra.mrb[0].mxu0 %v1114
      %v1207 = vpop.f32.mrb[0].mxu0
      %v1208 = vadd.f32 %v1079, %v1207
      %v1209 = vpop.f32.mrb[0].mxu0
      %1210 = vmatprep.mubr.f32.mxu0 0.0
      %1211 = vmatmul.mubr.f32.gmra.mrb[0].mxu0 %v1117
      %v1212 = vpop.f32.mrb[0].mxu0
      %v1213 = vadd.f32 %v1084, %v1212
      %v1214 = vpop.f32.mrb[0].mxu0
      %1215 = vmatprep.mubr.f32.mxu0 0.0
      %1216 = vmatmul.mubr.f32.gmra.mrb[0].mxu0 %v1120
      %v1217 = vpop.f32.mrb[0].mxu0
      %v1218 = vadd.f32 %v1089, %v1217
      %v1219 = vpop.f32.mrb[0].mxu0
      %1220 = vmatprep.mubr.f32.mxu0 0.0
      %1221 = vmatmul.mubr.f32.gmra.mrb[0].mxu0 %v1123
      %v1222 = vpop.f32.mrb[0].mxu0
      %v1223 = vadd.f32 %v1094, %v1222
      %v1224 = vpop.f32.mrb[0].mxu0
      %1225 = vmatprep.mubr.f32.mxu0 0.0
      %1226 = vmatmul.mubr.f32.gmra.mrb[0].mxu0 %v1126
      %v1227 = vpop.f32.mrb[0].mxu0
      %v1228 = vadd.f32 %v1099, %v1227
      %v1229 = vpop.f32.mrb[0].mxu0
      %1230 = vmatprep.mubr.f32.mxu0 0.0
      %1231 = vmatmul.mubr.f32.gmra.mrb[0].mxu0 %v1129
      %v1232 = vpop.f32.mrb[0].mxu0
      %v1233 = vadd.f32 %v1104, %v1232
      %v1234 = vpop.f32.mrb[0].mxu0
      %1235 = vdwg.mxu0
      %v1237 = vlaneseq
      %v1238 = vshrl.u32 %v1237, 7
      %v1239 = vsub.s32 0, %v1238
      %v1240 = vrot.slane %v175, %v1239
      %v1243 = vsel %vm219, %v1198, 0
      %v1246 = vsel %vm219, %v1203, 0
      %v1249 = vsel %vm219, %v1208, 0
      %v1252 = vsel %vm219, %v1213, 0
      %v1255 = vsel %vm219, %v1218, 0
      %v1258 = vsel %vm219, %v1223, 0
      %v1261 = vsel %vm219, %v1228, 0
      %v1264 = vsel %vm219, %v1233, 0
      %v1267 = vsel %vm219, %v171, 0
      %v1270 = vsel %vm219, %v172, 0
      %v1273 = vsel %vm219, %v173, 0
      %v1276 = vsel %vm219, %v174, 0
      %1278 = vmatprep.subr.mxu0 0.0
      %1279 = vmatpush1.xpose.msra.mxu0 %v1267
      %1280 = vmatprep.subr.mxu0 0.0
      %1281 = vmatpush1.xpose.msra.mxu0 %v1270
      %1282 = vmatprep.subr.mxu0 0.0
      %1283 = vmatpush1.xpose.msra.mxu0 %v1273
      %1284 = vmatprep.subr.mxu0 0.0
      %1285 = vmatpush1.xpose.msra.mxu0 %v1276
      %1286 = vmatprep.subr.mxu0 0.0
      %1287 = vmatpush1.xpose.msra.mxu0 0.0
      %1288 = vmatprep.subr.mxu0 0.0
      %1289 = vmatpush1.xpose.msra.mxu0 0.0
      %1290 = vmatprep.subr.mxu0 0.0
      %1291 = vmatpush1.xpose.msra.mxu0 0.0
      %1292 = vmatprep.subr.mxu0 0.0
      %1293 = vmatpush1.xpose.msra.mxu0 0.0
      %1294 = vmatprep.subr.mxu0 0.0
      %1295 = vmatpush1.xpose.msra.mxu0 0.0
      %1296 = vmatprep.subr.mxu0 0.0
      %1297 = vmatpush1.xpose.msra.mxu0 0.0
      %1298 = vmatprep.subr.mxu0 0.0
      %1299 = vmatpush1.xpose.msra.mxu0 0.0
      %1300 = vmatprep.subr.mxu0 0.0
      %1301 = vmatpush1.xpose.msra.mxu0 0.0
      %1302 = vmatprep.subr.mxu0 0.0
      %1303 = vmatpush1.xpose.msra.mxu0 0.0
      %1304 = vmatprep.subr.mxu0 0.0
      %1305 = vmatpush1.xpose.msra.mxu0 0.0
      %1306 = vmatprep.subr.mxu0 0.0
      %1307 = vmatpush1.xpose.msra.mxu0 0.0
      %1308 = vmatprep.subr.mxu0 0.0
      %1309 = vmatpush1.xpose.msra.mxu0 0.0
      %1310 = vmatprep.subr.mxu0 0.0
      %1311 = vmatpush1.xpose.msra.mxu0 0.0
      %1312 = vmatprep.subr.mxu0 0.0
      %1313 = vmatpush1.xpose.msra.mxu0 0.0
      %1314 = vmatprep.subr.mxu0 0.0
      %1315 = vmatpush1.xpose.msra.mxu0 0.0
      %1316 = vmatprep.subr.mxu0 0.0
      %1317 = vmatpush1.xpose.msra.mxu0 0.0
      %1318 = vmatprep.subr.mxu0 0.0
      %1319 = vmatpush1.xpose.msra.mxu0 0.0
      %1320 = vmatprep.subr.mxu0 0.0
      %1321 = vmatpush1.xpose.msra.mxu0 0.0
      %1322 = vmatprep.subr.mxu0 0.0
      %1323 = vmatpush1.xpose.msra.mxu0 0.0
      %1324 = vmatprep.subr.mxu0 0.0
      %1325 = vmatpush1.xpose.msra.mxu0 0.0
      %1326 = vmatprep.subr.mxu0 0.0
      %1327 = vmatpush1.xpose.msra.mxu0 0.0
      %1328 = vmatprep.subr.mxu0 0.0
      %1329 = vmatpush1.xpose.msra.mxu0 0.0
      %1330 = vmatprep.subr.mxu0 0.0
      %1331 = vmatpush1.xpose.msra.mxu0 0.0
      %1332 = vmatprep.subr.mxu0 0.0
      %1333 = vmatpush1.xpose.msra.mxu0 0.0
      %1334 = vmatprep.subr.mxu0 0.0
      %1335 = vmatpush1.xpose.msra.mxu0 0.0
      %1336 = vmatprep.subr.mxu0 0.0
      %1337 = vmatpush1.xpose.msra.mxu0 0.0
      %1338 = vmatprep.subr.mxu0 0.0
      %1339 = vmatpush1.xpose.msra.mxu0 0.0
      %1340 = vmatprep.subr.mxu0 0.0
      %1341 = vmatpush1.xpose.msra.mxu0 0.0
      %1342 = vmatprep.mubr.f32.mxu0 0.0
      %1343 = vmatmul.mubr.f32.gmra.mrb[0].mxu0 %v1243
      %v1344 = vpop.f32.mrb[0].mxu0
      %v1345 = vadd.f32 %v1240, %v1344
      %v1346 = vpop.f32.mrb[0].mxu0
      %1347 = vmatprep.mubr.f32.mxu0 0.0
      %1348 = vmatmul.mubr.f32.gmra.mrb[0].mxu0 %v1246
      %v1349 = vpop.f32.mrb[0].mxu0
      %v1350 = vadd.f32 %v1240, %v1349
      %v1351 = vpop.f32.mrb[0].mxu0
      %1352 = vmatprep.mubr.f32.mxu0 0.0
      %1353 = vmatmul.mubr.f32.gmra.mrb[0].mxu0 %v1249
      %v1354 = vpop.f32.mrb[0].mxu0
      %v1355 = vadd.f32 %v1240, %v1354
      %v1356 = vpop.f32.mrb[0].mxu0
      %1357 = vmatprep.mubr.f32.mxu0 0.0
      %1358 = vmatmul.mubr.f32.gmra.mrb[0].mxu0 %v1252
      %v1359 = vpop.f32.mrb[0].mxu0
      %v1360 = vadd.f32 %v1240, %v1359
      %v1361 = vpop.f32.mrb[0].mxu0
      %1362 = vmatprep.mubr.f32.mxu0 0.0
      %1363 = vmatmul.mubr.f32.gmra.mrb[0].mxu0 %v1255
      %v1364 = vpop.f32.mrb[0].mxu0
      %v1365 = vadd.f32 %v1240, %v1364
      %v1366 = vpop.f32.mrb[0].mxu0
      %1367 = vmatprep.mubr.f32.mxu0 0.0
      %1368 = vmatmul.mubr.f32.gmra.mrb[0].mxu0 %v1258
      %v1369 = vpop.f32.mrb[0].mxu0
      %v1370 = vadd.f32 %v1240, %v1369
      %v1371 = vpop.f32.mrb[0].mxu0
      %1372 = vmatprep.mubr.f32.mxu0 0.0
      %1373 = vmatmul.mubr.f32.gmra.mrb[0].mxu0 %v1261
      %v1374 = vpop.f32.mrb[0].mxu0
      %v1375 = vadd.f32 %v1240, %v1374
      %v1376 = vpop.f32.mrb[0].mxu0
      %1377 = vmatprep.mubr.f32.mxu0 0.0
      %1378 = vmatmul.mubr.f32.gmra.mrb[0].mxu0 %v1264
      %v1379 = vpop.f32.mrb[0].mxu0
      %v1380 = vadd.f32 %v1240, %v1379
      %v1381 = vpop.f32.mrb[0].mxu0
      %1382 = vdwg.mxu0
      %1383 = vst.msk [vmem:[%s170] sm:$0xff] %vm219, %v1345
      %1384 = vst.msk [vmem:[%s170 + $0x8] sm:$0xff] %vm219, %v1350
      %1385 = vst.msk [vmem:[%s170 + $0x10] sm:$0xff] %vm219, %v1355
      %1386 = vst.msk [vmem:[%s170 + $0x18] sm:$0xff] %vm219, %v1360
      %1387 = vst.msk [vmem:[%s170 + $0x20] sm:$0xff] %vm219, %v1365
      %1388 = vst.msk [vmem:[%s170 + $0x28] sm:$0xff] %vm219, %v1370
      %1389 = vst.msk [vmem:[%s170 + $0x30] sm:$0xff] %vm219, %v1375
      %1390 = vst.msk [vmem:[%s170 + $0x38] sm:$0xff] %vm219, %v1380
      %p1391 = scmp.lt.s32.totalorder %s14, 1
      %s1392 = scalar_select %p1391, %s14, 1
      %s1393 = smul.addr %s1392, 40
      %s1394 = smul.addr %s1393, 8
      %s1395 = scalar_lea.vmem %s3, %s1394
      // Predicated region
      $region33: #{tpu_custom_call.1} parent=31 // pred_check
        %p1396 = pneg %p100
      $region34: #{tpu_custom_call.1} parent=31 // pred_check_branch
        %1398 = sbr.rel (%p1396) target = $region36
      $region35: #{tpu_custom_call.1} parent=31 // pred_region
        _
      $region36: #{tpu_custom_call.1} parent=31 // pred_fallthru
        _
    $region32: #{tpu_custom_call.1} parent=5 // pred_fallthru
      _
    %p1399 = scmp.le.s32.totalorder 2, %s9
    // Predicated region
    $region37: #{tpu_custom_call.1} parent=5 // pred_check
      %p1400 = pneg %p1399
    $region38: #{tpu_custom_call.1} parent=5 // pred_check_branch
      %1402 = sbr.rel (%p1400) target = $region40
    $region39: #{tpu_custom_call.1} parent=5 // pred_region
      %s1403 = ssub.s32 %s9, 2
      // Predicated region
      $region41: #{tpu_custom_call.1} parent=39 // pred_check
        %p1404 = pneg %p106
      $region42: #{tpu_custom_call.1} parent=39 // pred_check_branch
        %1406 = sbr.rel (%p1404) target = $region44
      $region43: #{tpu_custom_call.1} parent=39 // pred_region
        %p1407 = scmp.lt.s32.totalorder %s15, 1
        %s1408 = scalar_select %p1407, %s15, 1
        %s1409 = smul.addr %s1408, 40
        %s1410 = smul.addr %s1409, 8
        %s1411 = scalar_lea.vmem %s3, %s1410
      $region44: #{tpu_custom_call.1} parent=39 // pred_fallthru
        _
    $region40: #{tpu_custom_call.1} parent=5 // pred_fallthru
      _
  $region6: #{tpu_custom_call.1} parent=0 // loop_footer
    %s13 = sadd.s32 1, %s9
  $region7: #{tpu_custom_call.1} parent=0 // loop_footer_branch
    %8 = sbr.rel target = $region3
  $region8: #{tpu_custom_call.1} parent=0 // loop_exit
    _

</llo_original>
